<compile_context>
chip_gen: v7x
topology: tpu7x:2x2x1
jax: 0.10.0
libtpu: 0.0.40
codegen_flags: <defaults>
</compile_context>

<pallas_src>
import functools
import math

import jax
import jax.numpy as jnp
from jax import lax
from jax.experimental import pallas as pl
from jax.experimental.pallas import tpu as pltpu


def _attn_kernel_batch(x_ref, wq_ref, wk_ref, wv_ref, out_ref, *rest,
                       n_head, save_attention):
    """grid=(B,): one grid step = one batch element, all heads.

    x_ref:   (1, L, D)    current batch element
    w*_ref:  (D, D)       pre-transposed projections (scale folded into Wq)
    out_ref: (1, L, D)    output, heads concatenated along features
    a_ref:   (1, H, L, L) attention weights (save_attention only)
    o_scr:   (L, D)       VMEM scratch accumulator for head outputs
    """
    if save_attention:
        a_ref, o_scr = rest
    else:
        a_ref = None
        (o_scr,) = rest

    x = x_ref[0]                                      # (L, D)
    in_dtype = x.dtype

    # Full-width lane-dense projections, f32 accumulation on the MXU.
    q = jnp.dot(x, wq_ref[...], preferred_element_type=jnp.float32)
    k = jnp.dot(x, wk_ref[...], preferred_element_type=jnp.float32)
    v = jnp.dot(x, wv_ref[...], preferred_element_type=jnp.float32)
    # Single downcast so the f32 copies die early (no-op for f32 inputs).
    q = q.astype(in_dtype)
    k = k.astype(in_dtype)
    v = v.astype(in_dtype)

    L, D = x.shape
    dh = D // n_head

    for h in range(n_head):                           # static unroll over heads
        sl = slice(h * dh, (h + 1) * dh)
        qh = q[:, sl]
        kh = k[:, sl]
        vh = v[:, sl]

        # s = qh @ kh.T without materializing the transpose; the softmax scale
        # is already folded into the Q projection weights (wrapper).
        s = lax.dot_general(qh, kh, (((1,), (1,)), ((), ())),
                            preferred_element_type=jnp.float32)  # (L, L) f32

        # Softmax over the key axis, math in f32.
        s_max = jnp.max(s, axis=-1, keepdims=True)
        e = jnp.exp(s - s_max)
        denom = jnp.sum(e, axis=-1, keepdims=True)
        inv = pl.reciprocal(denom, approx=False)                  # (L, 1) f32

        if save_attention:
            a = e * inv                                           # (L, L) f32
            a_ref[0, h] = a.astype(a_ref.dtype)
            o = jnp.dot(a.astype(in_dtype), vh,
                        preferred_element_type=jnp.float32)       # (L, dh)
        else:
            # Deferred normalization: normalize the (L, dh) output instead of
            # the (L, L) attention matrix (L*dh ops instead of L*L; no (L, L)
            # cast; one fewer live (L, L) f32 array).
            o = jnp.dot(e.astype(in_dtype), vh,
                        preferred_element_type=jnp.float32)
            o = o * inv

        # Only this head's output stays live; single full-width store below.
        o_scr[:, sl] = o.astype(o_scr.dtype)

    out_ref[0] = o_scr[...]                           # lane-dense (L, D) store


def _attn_kernel_per_head(x_ref, wq_ref, wk_ref, wv_ref, out_ref, a_ref):
    """grid=(B, H): one grid step = one (batch, head) pair (save path).

    x_ref:   (1, L, D)    current batch element (index constant in h)
    w*_ref:  (D, dh)      this head's projection columns (scale in Wq)
    out_ref: (1, L, dh)   this head's slice of the output
    a_ref:   (1, 1, L, L) this head's attention weights
    """
    x = x_ref[0]
    in_dtype = x.dtype

    q = jnp.dot(x, wq_ref[...], preferred_element_type=jnp.float32).astype(in_dtype)
    k = jnp.dot(x, wk_ref[...], preferred_element_type=jnp.float32).astype(in_dtype)
    v = jnp.dot(x, wv_ref[...], preferred_element_type=jnp.float32).astype(in_dtype)

    s = lax.dot_general(q, k, (((1,), (1,)), ((), ())),
                        preferred_element_type=jnp.float32)       # (L, L) f32
    s_max = jnp.max(s, axis=-1, keepdims=True)
    e = jnp.exp(s - s_max)
    denom = jnp.sum(e, axis=-1, keepdims=True)
    a = e * pl.reciprocal(denom, approx=False)

    a_ref[0, 0] = a.astype(a_ref.dtype)
    o = jnp.dot(a.astype(in_dtype), v, preferred_element_type=jnp.float32)
    out_ref[0] = o.astype(out_ref.dtype)


def temporal_self_attention(x, wq, wk, wv, n_head, save_attention=True,
                            a_dtype=None, heads_in_grid=None):
    """Pallas implementation of Temporal_SelfAttention.forward.

    x: (B, L, D); wq/wk/wv: (D, D) nn.Linear weights (y = x @ W.T).
    Returns (out, A) with out: (B, L, D) and A: (B, H, L, L) or None.
    """
    B, L, D = x.shape
    H = n_head
    assert D % H == 0, "d_model must be divisible by n_head"
    dh = D // H
    scale = 1.0 / math.sqrt(dh)
    if a_dtype is None:
        a_dtype = x.dtype   # bf16 inputs -> bf16 A writeback (half the HBM traffic)

    x_bytes = jnp.dtype(x.dtype).itemsize
    a_bytes = jnp.dtype(a_dtype).itemsize

    # One-time layout plumbing outside the kernel: transpose so the kernel
    # computes y = x @ W (head h = columns h*dh:(h+1)*dh), and fold the
    # softmax scale into the Q weights (zero in-kernel cost).
    wq_t = (wq * jnp.asarray(scale, wq.dtype)).T
    wk_t = wk.T
    wv_t = wv.T

    if heads_in_grid is None:
        # Split heads into the grid only when the (1, H, L, L) A block would
        # dominate VMEM and the per-head blocks stay lane/sublane aligned.
        heads_in_grid = (save_attention and dh % 128 == 0 and L % 8 == 0
                         and 2 * H * L * L * a_bytes > (8 << 20))

    if save_attention and heads_in_grid:
        est = (2 * L * D * x_bytes              # x block (double-buffered)
               + 6 * D * dh * x_bytes           # 3 weight column blocks
               + 2 * L * dh * x_bytes           # out block
               + 2 * L * L * a_bytes            # A block
               + 3 * L * dh * (4 + x_bytes)     # f32 QKV + downcast copies
               + 3 * L * L * 4)                 # scores / exp / A live f32
        vmem_limit = int(min(max(2 * est, 8 << 20), 64 << 20))

        out, A = pl.pallas_call(
            _attn_kernel_per_head,
            out_shape=(jax.ShapeDtypeStruct((B, L, D), x.dtype),
                       jax.ShapeDtypeStruct((B, H, L, L), a_dtype)),
            grid_spec=pltpu.PrefetchScalarGridSpec(
                num_scalar_prefetch=0,
                grid=(B, H),
                in_specs=[
                    pl.BlockSpec((1, L, D), lambda b, h: (b, 0, 0)),  # x[b] (const in h)
                    pl.BlockSpec((D, dh), lambda b, h: (0, h)),       # Wq.T*scale cols
                    pl.BlockSpec((D, dh), lambda b, h: (0, h)),       # Wk.T cols
                    pl.BlockSpec((D, dh), lambda b, h: (0, h)),       # Wv.T cols
                ],
                out_specs=(
                    pl.BlockSpec((1, L, dh), lambda b, h: (b, 0, h)),
                    pl.BlockSpec((1, 1, L, L), lambda b, h: (b, h, 0, 0)),
                ),
            ),
            compiler_params=pltpu.CompilerParams(
                dimension_semantics=("parallel", "parallel"),
                vmem_limit_bytes=vmem_limit),
        )(x, wq_t, wk_t, wv_t)
        return out, A

    # ---- grid=(B,): one batch element (all heads) per step ----
    est = (2 * L * D * x_bytes                  # x block (double-buffered)
           + 6 * D * D * x_bytes                # 3 weights, double-buffered
           + 2 * L * D * x_bytes                # out block
           + L * D * x_bytes                    # output scratch
           + 3 * L * D * (4 + x_bytes)          # f32 QKV + downcast copies
           + 3 * L * L * 4)                     # per-head scores / exp / A f32
    if save_attention:
        est += 2 * H * L * L * a_bytes          # A output block
    vmem_limit = int(min(max(2 * est, 8 << 20), 64 << 20))

    out_shapes = [jax.ShapeDtypeStruct((B, L, D), x.dtype)]
    out_specs = [pl.BlockSpec((1, L, D), lambda b: (b, 0, 0))]
    if save_attention:
        out_shapes.append(jax.ShapeDtypeStruct((B, H, L, L), a_dtype))
        out_specs.append(pl.BlockSpec((1, H, L, L), lambda b: (b, 0, 0, 0)))

    kernel = functools.partial(_attn_kernel_batch, n_head=H,
                               save_attention=save_attention)

    results = pl.pallas_call(
        kernel,
        out_shape=tuple(out_shapes),
        grid_spec=pltpu.PrefetchScalarGridSpec(
            num_scalar_prefetch=0,
            grid=(B,),
            in_specs=[
                pl.BlockSpec((1, L, D), lambda b: (b, 0, 0)),   # x[b]
                pl.BlockSpec((D, D), lambda b: (0, 0)),         # Wq.T*scale (resident)
                pl.BlockSpec((D, D), lambda b: (0, 0)),         # Wk.T
                pl.BlockSpec((D, D), lambda b: (0, 0)),         # Wv.T
            ],
            out_specs=tuple(out_specs),
            scratch_shapes=[pltpu.VMEM((L, D), x.dtype)],       # head-output accum
        ),
        compiler_params=pltpu.CompilerParams(
            dimension_semantics=("parallel",),
            vmem_limit_bytes=vmem_limit),
    )(x, wq_t, wk_t, wv_t)

    if save_attention:
        out, A = results
        return out, A
    (out,) = results
    return out, None


def _reference(x, wq, wk, wv, n_head):
    """Pure-JAX reference mirroring the PyTorch forward."""
    B, L, D = x.shape
    H = n_head
    dh = D // H
    q = (x @ wq.T).reshape(B, L, H, dh)
    k = (x @ wk.T).reshape(B, L, H, dh)
    v = (x @ wv.T).reshape(B, L, H, dh)
    scale = 1.0 / math.sqrt(dh)
    scores = jnp.einsum('blhd,bshd->bhls', q, k)
    A = jax.nn.softmax(scale * scores, axis=-1)
    V = jnp.einsum('bhls,bshd->blhd', A, v)
    return V.reshape(B, L, D), A


def _make_inputs(key, B, L, D):
    kx, kq, kk, kv = jax.random.split(key, 4)
    x = jax.random.normal(kx, (B, L, D), dtype=jnp.float32)
    bound = 1.0 / math.sqrt(D)  # nn.Linear-style uniform init range
    wq = jax.random.uniform(kq, (D, D), jnp.float32, -bound, bound)
    wk = jax.random.uniform(kk, (D, D), jnp.float32, -bound, bound)
    wv = jax.random.uniform(kv, (D, D), jnp.float32, -bound, bound)
    return x, wq, wk, wv


if __name__ == "__main__":
    # Small config consistent with the module: d_model=64, n_head=4, B=2, L=8.
    # dh=16 is a power of four, so the folded softmax scale (0.25) is a power
    # of two and commutes exactly with any dtype rounding on the MXU path.
    B, L, D, H = 2, 8, 64, 4
    x, wq, wk, wv = _make_inputs(jax.random.PRNGKey(0), B, L, D)
    out_ref, A_ref = _reference(x, wq, wk, wv, H)

    # Tolerances account for TPU default (bf16-pass) matmul precision and for
    # algebraic rearrangements that are exact in real arithmetic (scale folded
    # into Wq, normalization deferred to the (L, dh) output in the no-A path).
    TOL = dict(atol=5e-3, rtol=5e-3)

    # save_attention=True, (B,) grid (all heads in one step).
    out, A = temporal_self_attention(x, wq, wk, wv, n_head=H,
                                     save_attention=True)
    jax.block_until_ready((out, A))
    assert out.shape == (B, L, D) and A.shape == (B, H, L, L)
    assert jnp.allclose(out, out_ref, **TOL)
    assert jnp.allclose(A, A_ref, **TOL)

    # save_attention=False: no A materialization, deferred normalization.
    out2, A2 = temporal_self_attention(x, wq, wk, wv, n_head=H,
                                       save_attention=False)
    out2 = jax.block_until_ready(out2)
    assert A2 is None
    assert jnp.allclose(out2, out_ref, **TOL)

    # Heads-in-grid save path (grid=(B, H)) on a lane-aligned config (dh=128):
    # verifies the per-head block indexing against the JAX reference within
    # default-MXU-precision tolerance.
    B2, L2, D2, H2 = 2, 128, 512, 4
    x2, wq2, wk2, wv2 = _make_inputs(jax.random.PRNGKey(1), B2, L2, D2)
    out3, A3 = temporal_self_attention(x2, wq2, wk2, wv2, n_head=H2,
                                       save_attention=True, heads_in_grid=True)
    jax.block_until_ready((out3, A3))
    out_ref2, A_ref2 = _reference(x2, wq2, wk2, wv2, H2)
    assert out3.shape == (B2, L2, D2) and A3.shape == (B2, H2, L2, L2)
    assert jnp.allclose(out3, out_ref2, atol=5e-2, rtol=5e-2)
    assert jnp.allclose(A3, A_ref2, atol=5e-2, rtol=5e-2)

    print("KERNEL_OK")
</pallas_src>

<mosaic_0001>
module attributes {stable_mosaic.version = 11 : i64} {
  func.func @_attn_kernel_batch(%arg0: i32, %arg1: memref<1x8x64xf32, #tpu.memory_space<vmem>>, %arg2: memref<64x64xf32, #tpu.memory_space<vmem>>, %arg3: memref<64x64xf32, #tpu.memory_space<vmem>>, %arg4: memref<64x64xf32, #tpu.memory_space<vmem>>, %arg5: memref<1x8x64xf32, #tpu.memory_space<vmem>>, %arg6: memref<1x4x8x8xf32, #tpu.memory_space<vmem>>, %arg7: memref<8x64xf32, #tpu.memory_space<vmem>>) attributes {dimension_semantics = [#tpu.dimension_semantics<parallel>], iteration_bounds = array<i64: 2>, scalar_prefetch = 0 : i64, scratch_operands = 1 : i64, tpu.core_type = #tpu.core_type<tc>, window_params = [{transform_indices = @transform_0, window_bounds = array<i64: 1, 8, 64>}, {pipeline_mode = #tpu.pipeline_mode<synchronous>, transform_indices = @transform_1, window_bounds = array<i64: 64, 64>}, {pipeline_mode = #tpu.pipeline_mode<synchronous>, transform_indices = @transform_2, window_bounds = array<i64: 64, 64>}, {pipeline_mode = #tpu.pipeline_mode<synchronous>, transform_indices = @transform_3, window_bounds = array<i64: 64, 64>}, {transform_indices = @transform_4, window_bounds = array<i64: 1, 8, 64>}, {transform_indices = @transform_5, window_bounds = array<i64: 1, 4, 8, 8>}]} {
    %c0 = arith.constant 0 : index
    %c0_0 = arith.constant 0 : index
    %c0_1 = arith.constant 0 : index
    %0 = vector.load %arg1[%c0, %c0_0, %c0_1] : memref<1x8x64xf32, #tpu.memory_space<vmem>>, vector<1x8x64xf32>
    %1 = vector.shape_cast %0 : vector<1x8x64xf32> to vector<8x64xf32>
    %c0_2 = arith.constant 0 : index
    %c0_3 = arith.constant 0 : index
    %2 = vector.load %arg2[%c0_2, %c0_3] : memref<64x64xf32, #tpu.memory_space<vmem>>, vector<64x64xf32>
    %cst = arith.constant dense<0.000000e+00> : vector<8x64xf32>
    %3 = tpu.matmul %1, %2, %cst {dimension_numbers = #tpu.dot_dimension_numbers<[1], [0], [0], [1], [0, 0, 1, 1], [], []>} : vector<8x64xf32>, vector<64x64xf32>, vector<8x64xf32> -> vector<8x64xf32>
    %c0_4 = arith.constant 0 : index
    %c0_5 = arith.constant 0 : index
    %4 = vector.load %arg3[%c0_4, %c0_5] : memref<64x64xf32, #tpu.memory_space<vmem>>, vector<64x64xf32>
    %cst_6 = arith.constant dense<0.000000e+00> : vector<8x64xf32>
    %5 = tpu.matmul %1, %4, %cst_6 {dimension_numbers = #tpu.dot_dimension_numbers<[1], [0], [0], [1], [0, 0, 1, 1], [], []>} : vector<8x64xf32>, vector<64x64xf32>, vector<8x64xf32> -> vector<8x64xf32>
    %c0_7 = arith.constant 0 : index
    %c0_8 = arith.constant 0 : index
    %6 = vector.load %arg4[%c0_7, %c0_8] : memref<64x64xf32, #tpu.memory_space<vmem>>, vector<64x64xf32>
    %cst_9 = arith.constant dense<0.000000e+00> : vector<8x64xf32>
    %7 = tpu.matmul %1, %6, %cst_9 {dimension_numbers = #tpu.dot_dimension_numbers<[1], [0], [0], [1], [0, 0, 1, 1], [], []>} : vector<8x64xf32>, vector<64x64xf32>, vector<8x64xf32> -> vector<8x64xf32>
    %8 = vector.extract_strided_slice %3 {offsets = [0, 0], sizes = [8, 16], strides = [1, 1]} : vector<8x64xf32> to vector<8x16xf32>
    %9 = vector.extract_strided_slice %5 {offsets = [0, 0], sizes = [8, 16], strides = [1, 1]} : vector<8x64xf32> to vector<8x16xf32>
    %10 = vector.extract_strided_slice %7 {offsets = [0, 0], sizes = [8, 16], strides = [1, 1]} : vector<8x64xf32> to vector<8x16xf32>
    %cst_10 = arith.constant dense<0.000000e+00> : vector<8x8xf32>
    %11 = tpu.matmul %8, %9, %cst_10 {dimension_numbers = #tpu.dot_dimension_numbers<[1], [1], [0], [0], [0, 0, 1, 0], [], []>} : vector<8x16xf32>, vector<8x16xf32>, vector<8x8xf32> -> vector<8x8xf32>
    %cst_11 = arith.constant dense<0xFF800000> : vector<8xf32>
    %12 = vector.multi_reduction <maximumf>, %11, %cst_11 [1] : vector<8x8xf32> to vector<8xf32>
    %13 = vector.shape_cast %12 : vector<8xf32> to vector<8x1xf32>
    %14 = vector.broadcast %13 : vector<8x1xf32> to vector<8x8xf32>
    %15 = arith.subf %11, %14 : vector<8x8xf32>
    %16 = math.exp %15 : vector<8x8xf32>
    %cst_12 = arith.constant dense<0.000000e+00> : vector<8xf32>
    %17 = vector.multi_reduction <add>, %16, %cst_12 [1] : vector<8x8xf32> to vector<8xf32>
    %18 = vector.shape_cast %17 : vector<8xf32> to vector<8x1xf32>
    %19 = tpu.reciprocal %18 : vector<8x1xf32> -> vector<8x1xf32>
    %20 = vector.broadcast %19 : vector<8x1xf32> to vector<8x8xf32>
    %21 = arith.mulf %16, %20 : vector<8x8xf32>
    %c0_13 = arith.constant 0 : index
    %c0_14 = arith.constant 0 : index
    %c0_15 = arith.constant 0 : index
    %c0_16 = arith.constant 0 : index
    %22 = vector.load %arg6[%c0_13, %c0_14, %c0_15, %c0_16] : memref<1x4x8x8xf32, #tpu.memory_space<vmem>>, vector<1x1x8x8xf32>
    %23 = vector.shape_cast %22 : vector<1x1x8x8xf32> to vector<8x8xf32>
    %24 = vector.shape_cast %21 : vector<8x8xf32> to vector<1x1x8x8xf32>
    tpu.vector_store %arg6[%c0_13, %c0_14, %c0_15, %c0_16], %24 {strides = array<i32>} : memref<1x4x8x8xf32, #tpu.memory_space<vmem>>, vector<1x1x8x8xf32>,
    %cst_17 = arith.constant dense<0.000000e+00> : vector<8x16xf32>
    %25 = tpu.matmul %21, %10, %cst_17 {dimension_numbers = #tpu.dot_dimension_numbers<[1], [0], [0], [1], [0, 0, 1, 1], [], []>} : vector<8x8xf32>, vector<8x16xf32>, vector<8x16xf32> -> vector<8x16xf32>
    %c0_18 = arith.constant 0 : index
    %c0_19 = arith.constant 0 : index
    %26 = vector.load %arg7[%c0_18, %c0_19] : memref<8x64xf32, #tpu.memory_space<vmem>>, vector<8x16xf32>
    tpu.vector_store %arg7[%c0_18, %c0_19], %25 {strides = array<i32>} : memref<8x64xf32, #tpu.memory_space<vmem>>, vector<8x16xf32>,
    %27 = vector.extract_strided_slice %3 {offsets = [0, 16], sizes = [8, 16], strides = [1, 1]} : vector<8x64xf32> to vector<8x16xf32>
    %28 = vector.extract_strided_slice %5 {offsets = [0, 16], sizes = [8, 16], strides = [1, 1]} : vector<8x64xf32> to vector<8x16xf32>
    %29 = vector.extract_strided_slice %7 {offsets = [0, 16], sizes = [8, 16], strides = [1, 1]} : vector<8x64xf32> to vector<8x16xf32>
    %cst_20 = arith.constant dense<0.000000e+00> : vector<8x8xf32>
    %30 = tpu.matmul %27, %28, %cst_20 {dimension_numbers = #tpu.dot_dimension_numbers<[1], [1], [0], [0], [0, 0, 1, 0], [], []>} : vector<8x16xf32>, vector<8x16xf32>, vector<8x8xf32> -> vector<8x8xf32>
    %cst_21 = arith.constant dense<0xFF800000> : vector<8xf32>
    %31 = vector.multi_reduction <maximumf>, %30, %cst_21 [1] : vector<8x8xf32> to vector<8xf32>
    %32 = vector.shape_cast %31 : vector<8xf32> to vector<8x1xf32>
    %33 = vector.broadcast %32 : vector<8x1xf32> to vector<8x8xf32>
    %34 = arith.subf %30, %33 : vector<8x8xf32>
    %35 = math.exp %34 : vector<8x8xf32>
    %cst_22 = arith.constant dense<0.000000e+00> : vector<8xf32>
    %36 = vector.multi_reduction <add>, %35, %cst_22 [1] : vector<8x8xf32> to vector<8xf32>
    %37 = vector.shape_cast %36 : vector<8xf32> to vector<8x1xf32>
    %38 = tpu.reciprocal %37 : vector<8x1xf32> -> vector<8x1xf32>
    %39 = vector.broadcast %38 : vector<8x1xf32> to vector<8x8xf32>
    %40 = arith.mulf %35, %39 : vector<8x8xf32>
    %c0_23 = arith.constant 0 : index
    %c1 = arith.constant 1 : index
    %c0_24 = arith.constant 0 : index
    %c0_25 = arith.constant 0 : index
    %41 = vector.load %arg6[%c0_23, %c1, %c0_24, %c0_25] : memref<1x4x8x8xf32, #tpu.memory_space<vmem>>, vector<1x1x8x8xf32>
    %42 = vector.shape_cast %41 : vector<1x1x8x8xf32> to vector<8x8xf32>
    %43 = vector.shape_cast %40 : vector<8x8xf32> to vector<1x1x8x8xf32>
    tpu.vector_store %arg6[%c0_23, %c1, %c0_24, %c0_25], %43 {strides = array<i32>} : memref<1x4x8x8xf32, #tpu.memory_space<vmem>>, vector<1x1x8x8xf32>,
    %cst_26 = arith.constant dense<0.000000e+00> : vector<8x16xf32>
    %44 = tpu.matmul %40, %29, %cst_26 {dimension_numbers = #tpu.dot_dimension_numbers<[1], [0], [0], [1], [0, 0, 1, 1], [], []>} : vector<8x8xf32>, vector<8x16xf32>, vector<8x16xf32> -> vector<8x16xf32>
    %c0_27 = arith.constant 0 : index
    %c16 = arith.constant 16 : index
    %45 = vector.load %arg7[%c0_27, %c16] : memref<8x64xf32, #tpu.memory_space<vmem>>, vector<8x16xf32>
    tpu.vector_store %arg7[%c0_27, %c16], %44 {strides = array<i32>} : memref<8x64xf32, #tpu.memory_space<vmem>>, vector<8x16xf32>,
    %46 = vector.extract_strided_slice %3 {offsets = [0, 32], sizes = [8, 16], strides = [1, 1]} : vector<8x64xf32> to vector<8x16xf32>
    %47 = vector.extract_strided_slice %5 {offsets = [0, 32], sizes = [8, 16], strides = [1, 1]} : vector<8x64xf32> to vector<8x16xf32>
    %48 = vector.extract_strided_slice %7 {offsets = [0, 32], sizes = [8, 16], strides = [1, 1]} : vector<8x64xf32> to vector<8x16xf32>
    %cst_28 = arith.constant dense<0.000000e+00> : vector<8x8xf32>
    %49 = tpu.matmul %46, %47, %cst_28 {dimension_numbers = #tpu.dot_dimension_numbers<[1], [1], [0], [0], [0, 0, 1, 0], [], []>} : vector<8x16xf32>, vector<8x16xf32>, vector<8x8xf32> -> vector<8x8xf32>
    %cst_29 = arith.constant dense<0xFF800000> : vector<8xf32>
    %50 = vector.multi_reduction <maximumf>, %49, %cst_29 [1] : vector<8x8xf32> to vector<8xf32>
    %51 = vector.shape_cast %50 : vector<8xf32> to vector<8x1xf32>
    %52 = vector.broadcast %51 : vector<8x1xf32> to vector<8x8xf32>
    %53 = arith.subf %49, %52 : vector<8x8xf32>
    %54 = math.exp %53 : vector<8x8xf32>
    %cst_30 = arith.constant dense<0.000000e+00> : vector<8xf32>
    %55 = vector.multi_reduction <add>, %54, %cst_30 [1] : vector<8x8xf32> to vector<8xf32>
    %56 = vector.shape_cast %55 : vector<8xf32> to vector<8x1xf32>
    %57 = tpu.reciprocal %56 : vector<8x1xf32> -> vector<8x1xf32>
    %58 = vector.broadcast %57 : vector<8x1xf32> to vector<8x8xf32>
    %59 = arith.mulf %54, %58 : vector<8x8xf32>
    %c0_31 = arith.constant 0 : index
    %c2 = arith.constant 2 : index
    %c0_32 = arith.constant 0 : index
    %c0_33 = arith.constant 0 : index
    %60 = vector.load %arg6[%c0_31, %c2, %c0_32, %c0_33] : memref<1x4x8x8xf32, #tpu.memory_space<vmem>>, vector<1x1x8x8xf32>
    %61 = vector.shape_cast %60 : vector<1x1x8x8xf32> to vector<8x8xf32>
    %62 = vector.shape_cast %59 : vector<8x8xf32> to vector<1x1x8x8xf32>
    tpu.vector_store %arg6[%c0_31, %c2, %c0_32, %c0_33], %62 {strides = array<i32>} : memref<1x4x8x8xf32, #tpu.memory_space<vmem>>, vector<1x1x8x8xf32>,
    %cst_34 = arith.constant dense<0.000000e+00> : vector<8x16xf32>
    %63 = tpu.matmul %59, %48, %cst_34 {dimension_numbers = #tpu.dot_dimension_numbers<[1], [0], [0], [1], [0, 0, 1, 1], [], []>} : vector<8x8xf32>, vector<8x16xf32>, vector<8x16xf32> -> vector<8x16xf32>
    %c0_35 = arith.constant 0 : index
    %c32 = arith.constant 32 : index
    %64 = vector.load %arg7[%c0_35, %c32] : memref<8x64xf32, #tpu.memory_space<vmem>>, vector<8x16xf32>
    tpu.vector_store %arg7[%c0_35, %c32], %63 {strides = array<i32>} : memref<8x64xf32, #tpu.memory_space<vmem>>, vector<8x16xf32>,
    %65 = vector.extract_strided_slice %3 {offsets = [0, 48], sizes = [8, 16], strides = [1, 1]} : vector<8x64xf32> to vector<8x16xf32>
    %66 = vector.extract_strided_slice %5 {offsets = [0, 48], sizes = [8, 16], strides = [1, 1]} : vector<8x64xf32> to vector<8x16xf32>
    %67 = vector.extract_strided_slice %7 {offsets = [0, 48], sizes = [8, 16], strides = [1, 1]} : vector<8x64xf32> to vector<8x16xf32>
    %cst_36 = arith.constant dense<0.000000e+00> : vector<8x8xf32>
    %68 = tpu.matmul %65, %66, %cst_36 {dimension_numbers = #tpu.dot_dimension_numbers<[1], [1], [0], [0], [0, 0, 1, 0], [], []>} : vector<8x16xf32>, vector<8x16xf32>, vector<8x8xf32> -> vector<8x8xf32>
    %cst_37 = arith.constant dense<0xFF800000> : vector<8xf32>
    %69 = vector.multi_reduction <maximumf>, %68, %cst_37 [1] : vector<8x8xf32> to vector<8xf32>
    %70 = vector.shape_cast %69 : vector<8xf32> to vector<8x1xf32>
    %71 = vector.broadcast %70 : vector<8x1xf32> to vector<8x8xf32>
    %72 = arith.subf %68, %71 : vector<8x8xf32>
    %73 = math.exp %72 : vector<8x8xf32>
    %cst_38 = arith.constant dense<0.000000e+00> : vector<8xf32>
    %74 = vector.multi_reduction <add>, %73, %cst_38 [1] : vector<8x8xf32> to vector<8xf32>
    %75 = vector.shape_cast %74 : vector<8xf32> to vector<8x1xf32>
    %76 = tpu.reciprocal %75 : vector<8x1xf32> -> vector<8x1xf32>
    %77 = vector.broadcast %76 : vector<8x1xf32> to vector<8x8xf32>
    %78 = arith.mulf %73, %77 : vector<8x8xf32>
    %c0_39 = arith.constant 0 : index
    %c3 = arith.constant 3 : index
    %c0_40 = arith.constant 0 : index
    %c0_41 = arith.constant 0 : index
    %79 = vector.load %arg6[%c0_39, %c3, %c0_40, %c0_41] : memref<1x4x8x8xf32, #tpu.memory_space<vmem>>, vector<1x1x8x8xf32>
    %80 = vector.shape_cast %79 : vector<1x1x8x8xf32> to vector<8x8xf32>
    %81 = vector.shape_cast %78 : vector<8x8xf32> to vector<1x1x8x8xf32>
    tpu.vector_store %arg6[%c0_39, %c3, %c0_40, %c0_41], %81 {strides = array<i32>} : memref<1x4x8x8xf32, #tpu.memory_space<vmem>>, vector<1x1x8x8xf32>,
    %cst_42 = arith.constant dense<0.000000e+00> : vector<8x16xf32>
    %82 = tpu.matmul %78, %67, %cst_42 {dimension_numbers = #tpu.dot_dimension_numbers<[1], [0], [0], [1], [0, 0, 1, 1], [], []>} : vector<8x8xf32>, vector<8x16xf32>, vector<8x16xf32> -> vector<8x16xf32>
    %c0_43 = arith.constant 0 : index
    %c48 = arith.constant 48 : index
    %83 = vector.load %arg7[%c0_43, %c48] : memref<8x64xf32, #tpu.memory_space<vmem>>, vector<8x16xf32>
    tpu.vector_store %arg7[%c0_43, %c48], %82 {strides = array<i32>} : memref<8x64xf32, #tpu.memory_space<vmem>>, vector<8x16xf32>,
    %c0_44 = arith.constant 0 : index
    %c0_45 = arith.constant 0 : index
    %84 = vector.load %arg7[%c0_44, %c0_45] : memref<8x64xf32, #tpu.memory_space<vmem>>, vector<8x64xf32>
    %c0_46 = arith.constant 0 : index
    %c0_47 = arith.constant 0 : index
    %c0_48 = arith.constant 0 : index
    %85 = vector.load %arg5[%c0_46, %c0_47, %c0_48] : memref<1x8x64xf32, #tpu.memory_space<vmem>>, vector<1x8x64xf32>
    %86 = vector.shape_cast %85 : vector<1x8x64xf32> to vector<8x64xf32>
    %87 = vector.shape_cast %84 : vector<8x64xf32> to vector<1x8x64xf32>
    tpu.vector_store %arg5[%c0_46, %c0_47, %c0_48], %87 {strides = array<i32>} : memref<1x8x64xf32, #tpu.memory_space<vmem>>, vector<1x8x64xf32>,
    return
  }
  func.func @transform_0(%arg0: i32) -> (i32, i32, i32) {
    %c0_i32 = arith.constant 0 : i32
    %c0_i32_0 = arith.constant 0 : i32
    %c0_i32_1 = arith.constant 0 : i32
    return %arg0, %c0_i32, %c0_i32_0 : i32, i32, i32
  }
  func.func @transform_1(%arg0: i32) -> (i32, i32) {
    %c0_i32 = arith.constant 0 : i32
    %c0_i32_0 = arith.constant 0 : i32
    %c0_i32_1 = arith.constant 0 : i32
    return %c0_i32, %c0_i32_0 : i32, i32
  }
  func.func @transform_2(%arg0: i32) -> (i32, i32) {
    %c0_i32 = arith.constant 0 : i32
    %c0_i32_0 = arith.constant 0 : i32
    %c0_i32_1 = arith.constant 0 : i32
    return %c0_i32, %c0_i32_0 : i32, i32
  }
  func.func @transform_3(%arg0: i32) -> (i32, i32) {
    %c0_i32 = arith.constant 0 : i32
    %c0_i32_0 = arith.constant 0 : i32
    %c0_i32_1 = arith.constant 0 : i32
    return %c0_i32, %c0_i32_0 : i32, i32
  }
  func.func @transform_4(%arg0: i32) -> (i32, i32, i32) {
    %c0_i32 = arith.constant 0 : i32
    %c0_i32_0 = arith.constant 0 : i32
    %c0_i32_1 = arith.constant 0 : i32
    return %arg0, %c0_i32, %c0_i32_0 : i32, i32, i32
  }
  func.func @transform_5(%arg0: i32) -> (i32, i32, i32, i32) {
    %c0_i32 = arith.constant 0 : i32
    %c0_i32_0 = arith.constant 0 : i32
    %c0_i32_1 = arith.constant 0 : i32
    %c0_i32_2 = arith.constant 0 : i32
    return %arg0, %c0_i32, %c0_i32_0, %c0_i32_1 : i32, i32, i32, i32
  }
}

</mosaic_0001>

<llo_original>
// kernel: tpu_custom_call.1
$region0: #{tpu_custom_call.1}
  #allocation0 [shape = 'u32[]', space=smem, size = 0x4, offset = 0x4, fixed_abs, tag = 'smem constant byte address 0x4 - core index']
  #allocation1 [shape = 'u32[144,128]{1,0:T(1,128)}', space=vmem, size = 0x12000, scoped, tag = 'internal scratch']
  #allocation2 [shape = 'f32[8,64]{1,0:T(8,128)}', space=vmem, size = 0x1000, scoped, tag = 'scratch operand']
  %s0 = inlined_call_operand.hbm [shape: f32[2,8,64], index: 0, kind: input, shape index: {}]
  %s1 = inlined_call_operand.hbm [shape: f32[64,64], index: 1, kind: input, shape index: {}]
  %s2 = inlined_call_operand.hbm [shape: f32[64,64], index: 2, kind: input, shape index: {}]
  %s3 = inlined_call_operand.hbm [shape: f32[64,64], index: 3, kind: input, shape index: {}]
  %s4 = inlined_call_operand.hbm [shape: f32[2,8,64], index: 4, kind: output, shape index: {0}]
  %s5 = inlined_call_operand.hbm [shape: f32[2,4,8,8], index: 5, kind: output, shape index: {1}]
  %6 = xla_tuple %s4, %s5
  %s7 = sld [smem:[#allocation0]]
  $region73: #{tpu_custom_call.1} parent=0
    _
  %s9 = ssub.s32 1, %s7
  %s10 = scalar_select 0, %s9, %s7
  $region1: #{tpu_custom_call.1} parent=0
    #allocation3 [shape = 'u8[8192]{0}', space=vmem, size = 0x2000, scoped, tag = 'input window, operand 0']
    #allocation4 [shape = 's32[2]{0}', space=sflag, size = 0x8, scoped, tag = 'scoped memory for tpu_custom_call.1']
    #allocation5 [shape = 's32[2]{0}', space=sflag, size = 0x8, scoped, tag = 'scoped memory for tpu_custom_call.1']
    #allocation6 [shape = 'u8[32768]{0}', space=vmem, size = 0x8000, scoped, tag = 'input window, operand 1, single buffered']
    #allocation7 [shape = 's32[1]{0}', space=sflag, size = 0x4, scoped, tag = 'scoped memory for tpu_custom_call.1']
    #allocation8 [shape = 'u8[32768]{0}', space=vmem, size = 0x8000, scoped, tag = 'input window, operand 2, single buffered']
    #allocation9 [shape = 'u8[32768]{0}', space=vmem, size = 0x8000, scoped, tag = 'input window, operand 3, single buffered']
    #allocation10 [shape = 's32[1]{0}', space=sflag, size = 0x4, scoped, tag = 'scoped memory for tpu_custom_call.1']
    #allocation11 [shape = 'u8[8192]{0}', space=vmem, size = 0x2000, scoped, tag = 'output window, operand 0']
    #allocation12 [shape = 'u8[32768]{0}', space=vmem, size = 0x8000, scoped, tag = 'output window, operand 1']
    #allocation13 [shape = 's32[2]{0}', space=sflag, size = 0x8, scoped, tag = 'scoped memory for tpu_custom_call.1']
    %11 = vsyncpa [#allocation4], 0
    %s12 = scalar_lea.sflag [#allocation4], 1
    %13 = vsyncpa %s12, 0
    %14 = vsyncpa [#allocation7], 0
    %15 = vsyncpa [#allocation10], 0
    %16 = vsyncpa [#allocation5], 0
    %s17 = scalar_lea.sflag [#allocation5], 1
    %18 = vsyncpa %s17, 0
    %19 = vsyncpa [#allocation13], 0
    %s20 = scalar_lea.sflag [#allocation13], 1
    %21 = vsyncpa %s20, 0
    loop: start=0, step=1, limit=4
    $region2: #{tpu_custom_call.1} parent=1 // loop_pre_header
      _
    $region3: #{tpu_custom_call.1} parent=1 // loop_header
      %s23 = sphi 0, %s27
      %p24 = scmp.ge.s32.totalorder %s23, 4
      %s33 = sphi 0, %s35
      %s36 = sphi 0, %s33
      %s37 = sphi 0, %s36
      %s53 = sphi 0, %s37
      %s57 = sphi 0, %s57
      %s59 = sphi 0, %s57
      %s60 = sphi 0, %s59
      %s74 = sphi 0, %s60
      %s78 = sphi 0, %s78
      %s80 = sphi 0, %s78
      %s81 = sphi 0, %s80
      %s95 = sphi 0, %s81
      %s99 = sphi 0, %s99
      %s101 = sphi 0, %s99
      %s102 = sphi 0, %s101
      %s116 = sphi 0, %s102
      %s122 = sphi 0, %s124
      %s125 = sphi 0, %s122
      %s126 = sphi 0, %s125
      %s142 = sphi 0, %s126
      %s148 = sphi 0, %s150
      %s151 = sphi 0, %s148
      %s152 = sphi 0, %s151
      %s168 = sphi 0, %s152
    $region4: #{tpu_custom_call.1} parent=1 // loop_header_branch
      %26 = sbr.rel (%p24) target = $region8
    $region5: #{tpu_custom_call.1} parent=1 // loop_body
      %s28 = ssub.s32 %s23, 1
      %s29 = ssub.s32 %s23, 2
      %s30 = sadd.s32 %s23, 1
      %s31 = ssub.s32 %s23, %s30
      %p32 = scmp.eq.s32.totalorder %s31, 0
      %s34 = sadd.s32 %s33, 1
      %s35 = scalar_select %p32, %s33, %s34
      %p38 = pneg %p32
      %p39 = scmp.eq.s32.totalorder %s23, 1
      %p40 = por %p38, %p39
      %p41 = scmp.ne.s32.totalorder %s33, %s36
      %p42 = scmp.eq.s32.totalorder %s23, 0
      %p43 = por %p41, %p42
      %p44 = scmp.ne.s32.totalorder %s33, %s36
      %p45 = scmp.eq.s32.totalorder %s28, 1
      %p46 = por %p44, %p45
      %p47 = scmp.ne.s32.totalorder %s36, %s37
      %p48 = scmp.eq.s32.totalorder %s28, 0
      %p49 = por %p47, %p48
      %p50 = scmp.ne.s32.totalorder %s36, %s37
      %p51 = scmp.eq.s32.totalorder %s29, 1
      %p52 = por %p50, %p51
      %p54 = scmp.ne.s32.totalorder %s37, %s53
      %p55 = scmp.eq.s32.totalorder %s29, 0
      %p56 = por %p54, %p55
      %s58 = sadd.s32 %s57, 1
      %p61 = scmp.eq.s32.totalorder %s23, 1
      %p62 = scmp.ne.s32.totalorder %s57, %s59
      %p63 = scmp.eq.s32.totalorder %s23, 0
      %p64 = por %p62, %p63
      %p65 = scmp.ne.s32.totalorder %s57, %s59
      %p66 = scmp.eq.s32.totalorder %s28, 1
      %p67 = por %p65, %p66
      %p68 = scmp.ne.s32.totalorder %s59, %s60
      %p69 = scmp.eq.s32.totalorder %s28, 0
      %p70 = por %p68, %p69
      %p71 = scmp.ne.s32.totalorder %s59, %s60
      %p72 = scmp.eq.s32.totalorder %s29, 1
      %p73 = por %p71, %p72
      %p75 = scmp.ne.s32.totalorder %s60, %s74
      %p76 = scmp.eq.s32.totalorder %s29, 0
      %p77 = por %p75, %p76
      %s79 = sadd.s32 %s78, 1
      %p82 = scmp.eq.s32.totalorder %s23, 1
      %p83 = scmp.ne.s32.totalorder %s78, %s80
      %p84 = scmp.eq.s32.totalorder %s23, 0
      %p85 = por %p83, %p84
      %p86 = scmp.ne.s32.totalorder %s78, %s80
      %p87 = scmp.eq.s32.totalorder %s28, 1
      %p88 = por %p86, %p87
      %p89 = scmp.ne.s32.totalorder %s80, %s81
      %p90 = scmp.eq.s32.totalorder %s28, 0
      %p91 = por %p89, %p90
      %p92 = scmp.ne.s32.totalorder %s80, %s81
      %p93 = scmp.eq.s32.totalorder %s29, 1
      %p94 = por %p92, %p93
      %p96 = scmp.ne.s32.totalorder %s81, %s95
      %p97 = scmp.eq.s32.totalorder %s29, 0
      %p98 = por %p96, %p97
      %s100 = sadd.s32 %s99, 1
      %p103 = scmp.eq.s32.totalorder %s23, 1
      %p104 = scmp.ne.s32.totalorder %s99, %s101
      %p105 = scmp.eq.s32.totalorder %s23, 0
      %p106 = por %p104, %p105
      %p107 = scmp.ne.s32.totalorder %s99, %s101
      %p108 = scmp.eq.s32.totalorder %s28, 1
      %p109 = por %p107, %p108
      %p110 = scmp.ne.s32.totalorder %s101, %s102
      %p111 = scmp.eq.s32.totalorder %s28, 0
      %p112 = por %p110, %p111
      %p113 = scmp.ne.s32.totalorder %s101, %s102
      %p114 = scmp.eq.s32.totalorder %s29, 1
      %p115 = por %p113, %p114
      %p117 = scmp.ne.s32.totalorder %s102, %s116
      %p118 = scmp.eq.s32.totalorder %s29, 0
      %p119 = por %p117, %p118
      %s120 = ssub.s32 %s23, %s30
      %p121 = scmp.eq.s32.totalorder %s120, 0
      %s123 = sadd.s32 %s122, 1
      %s124 = scalar_select %p121, %s122, %s123
      %p127 = pneg %p121
      %p128 = scmp.eq.s32.totalorder %s23, 1
      %p129 = por %p127, %p128
      %p130 = scmp.ne.s32.totalorder %s122, %s125
      %p131 = scmp.eq.s32.totalorder %s23, 0
      %p132 = por %p130, %p131
      %p133 = scmp.ne.s32.totalorder %s122, %s125
      %p134 = scmp.eq.s32.totalorder %s28, 1
      %p135 = por %p133, %p134
      %p136 = scmp.ne.s32.totalorder %s125, %s126
      %p137 = scmp.eq.s32.totalorder %s28, 0
      %p138 = por %p136, %p137
      %p139 = scmp.ne.s32.totalorder %s125, %s126
      %p140 = scmp.eq.s32.totalorder %s29, 1
      %p141 = por %p139, %p140
      %p143 = scmp.ne.s32.totalorder %s126, %s142
      %p144 = scmp.eq.s32.totalorder %s29, 0
      %p145 = por %p143, %p144
      %s146 = ssub.s32 %s23, %s30
      %p147 = scmp.eq.s32.totalorder %s146, 0
      %s149 = sadd.s32 %s148, 1
      %s150 = scalar_select %p147, %s148, %s149
      %p153 = pneg %p147
      %p154 = scmp.eq.s32.totalorder %s23, 1
      %p155 = por %p153, %p154
      %p156 = scmp.ne.s32.totalorder %s148, %s151
      %p157 = scmp.eq.s32.totalorder %s23, 0
      %p158 = por %p156, %p157
      %p159 = scmp.ne.s32.totalorder %s148, %s151
      %p160 = scmp.eq.s32.totalorder %s28, 1
      %p161 = por %p159, %p160
      %p162 = scmp.ne.s32.totalorder %s151, %s152
      %p163 = scmp.eq.s32.totalorder %s28, 0
      %p164 = por %p162, %p163
      %p165 = scmp.ne.s32.totalorder %s151, %s152
      %p166 = scmp.eq.s32.totalorder %s29, 1
      %p167 = por %p165, %p166
      %p169 = scmp.ne.s32.totalorder %s152, %s168
      %p170 = scmp.eq.s32.totalorder %s29, 0
      %p171 = por %p169, %p170
      %p172 = scmp.le.s32.totalorder 1, %s23
      %p173 = scmp.lt.s32.totalorder %s23, 3
      %p174 = pnand %p172, %p173
      %p175 = pneg %p174
      // Predicated region
      $region9: #{tpu_custom_call.1} parent=5 // pred_check
        _
      $region10: #{tpu_custom_call.1} parent=5 // pred_check_branch
        %177 = sbr.rel (%p174) target = $region12
      $region11: #{tpu_custom_call.1} parent=5 // pred_region
        %s178 = ssub.s32 %s23, 1
        // Predicated region
        $region13: #{tpu_custom_call.1} parent=11 // pred_check
          %p179 = pneg %p70
        $region14: #{tpu_custom_call.1} parent=11 // pred_check_branch
          %181 = sbr.rel (%p179) target = $region16
        $region15: #{tpu_custom_call.1} parent=11 // pred_region
          %s183 = ssub.s32 1024, 1024
          %184 = vsyncadd [#allocation7], %s183
          %s185 = sshll.u32 [#allocation6], 4
          %s186 = int_to_ptr.vmem [resolvable:$true] %s185
          %191 = dma.hbm_to_vmem [thread:$0]  %s1, 1024, %s186, [#allocation7], 128, 128, 8
        $region16: #{tpu_custom_call.1} parent=11 // pred_fallthru
          _
        // Predicated region
        $region17: #{tpu_custom_call.1} parent=11 // pred_check
          %p192 = pneg %p91
        $region18: #{tpu_custom_call.1} parent=11 // pred_check_branch
          %194 = sbr.rel (%p192) target = $region20
        $region19: #{tpu_custom_call.1} parent=11 // pred_region
          %s196 = ssub.s32 1024, 1024
          %197 = vsyncadd [#allocation7], %s196
          %s198 = sshll.u32 [#allocation8], 4
          %s199 = int_to_ptr.vmem [resolvable:$true] %s198
          %204 = dma.hbm_to_vmem [thread:$0]  %s2, 1024, %s199, [#allocation7], 128, 128, 8
        $region20: #{tpu_custom_call.1} parent=11 // pred_fallthru
          _
        // Predicated region
        $region21: #{tpu_custom_call.1} parent=11 // pred_check
          %p205 = pneg %p112
        $region22: #{tpu_custom_call.1} parent=11 // pred_check_branch
          %207 = sbr.rel (%p205) target = $region24
        $region23: #{tpu_custom_call.1} parent=11 // pred_region
          %s209 = ssub.s32 1024, 1024
          %210 = vsyncadd [#allocation10], %s209
          %s211 = sshll.u32 [#allocation9], 4
          %s212 = int_to_ptr.vmem [resolvable:$true] %s211
          %217 = dma.hbm_to_vmem [thread:$0]  %s3, 1024, %s212, [#allocation10], 128, 128, 8
        $region24: #{tpu_custom_call.1} parent=11 // pred_fallthru
          _
      $region12: #{tpu_custom_call.1} parent=5 // pred_fallthru
        _
      %p218 = scmp.lt.s32.totalorder %s23, 2
      // Predicated region
      $region25: #{tpu_custom_call.1} parent=5 // pred_check
        %p219 = pneg %p218
      $region26: #{tpu_custom_call.1} parent=5 // pred_check_branch
        %221 = sbr.rel (%p219) target = $region28
      $region27: #{tpu_custom_call.1} parent=5 // pred_region
        // Predicated region
        $region29: #{tpu_custom_call.1} parent=27 // pred_check
          %p222 = pneg %p43
        $region30: #{tpu_custom_call.1} parent=27 // pred_check_branch
          %224 = sbr.rel (%p222) target = $region32
        $region31: #{tpu_custom_call.1} parent=27 // pred_region
          %s225 = sand.u32 %s33, 1
          %s226 = scalar_lea.sflag [#allocation4], %s225
          %s227 = sand.u32 %s33, 1
          %s228 = smul.addr %s227, 8
          %s229 = scalar_lea.vmem [#allocation3], %s228
          %s231 = ssub.s32 128, 128
          %232 = vsyncadd %s226, %s231
          %s233 = smul.addr %s23, 128
          %s234 = scalar_lea.hbm %s0, %s233
          %s236 = sshll.u32 %s229, 4
          %s237 = int_to_ptr.vmem [resolvable:$true] %s236
          %239 = dma.hbm_to_vmem [thread:$0]  %s234, 128, %s237, %s226
        $region32: #{tpu_custom_call.1} parent=27 // pred_fallthru
          _
      $region28: #{tpu_custom_call.1} parent=5 // pred_fallthru
        _
      %p240 = scmp.le.s32.totalorder 1, %s23
      %p241 = scmp.lt.s32.totalorder %s23, 3
      %p242 = pnand %p240, %p241
      %p243 = pneg %p242
      // Predicated region
      $region33: #{tpu_custom_call.1} parent=5 // pred_check
        _
      $region34: #{tpu_custom_call.1} parent=5 // pred_check_branch
        %245 = sbr.rel (%p242) target = $region36
      $region35: #{tpu_custom_call.1} parent=5 // pred_region
        %s246 = ssub.s32 %s23, 1
        %s247 = sand.u32 %s36, 1
        %s248 = scalar_lea.sflag [#allocation4], %s247
        %s249 = sand.u32 %s36, 1
        %s250 = smul.addr %s249, 8
        %s251 = scalar_lea.vmem [#allocation3], %s250
        // Predicated region
        $region37: #{tpu_custom_call.1} parent=35 // pred_check
          %p252 = pneg %p49
        $region38: #{tpu_custom_call.1} parent=35 // pred_check_branch
          %254 = sbr.rel (%p252) target = $region40
        $region39: #{tpu_custom_call.1} parent=35 // pred_region
          %255 = dma.done %s248, 128
        $region40: #{tpu_custom_call.1} parent=35 // pred_fallthru
          _
        // Predicated region
        $region41: #{tpu_custom_call.1} parent=35 // pred_check
          %p256 = pneg %p70
        $region42: #{tpu_custom_call.1} parent=35 // pred_check_branch
          %258 = sbr.rel (%p256) target = $region44
        $region43: #{tpu_custom_call.1} parent=35 // pred_region
          %259 = dma.done [#allocation7], 1024
        $region44: #{tpu_custom_call.1} parent=35 // pred_fallthru
          _
        // Predicated region
        $region45: #{tpu_custom_call.1} parent=35 // pred_check
          %p260 = pneg %p91
        $region46: #{tpu_custom_call.1} parent=35 // pred_check_branch
          %262 = sbr.rel (%p260) target = $region48
        $region47: #{tpu_custom_call.1} parent=35 // pred_region
          %263 = dma.done [#allocation7], 1024
        $region48: #{tpu_custom_call.1} parent=35 // pred_fallthru
          _
        // Predicated region
        $region49: #{tpu_custom_call.1} parent=35 // pred_check
          %p264 = pneg %p112
        $region50: #{tpu_custom_call.1} parent=35 // pred_check_branch
          %266 = sbr.rel (%p264) target = $region52
        $region51: #{tpu_custom_call.1} parent=35 // pred_region
          %267 = dma.done [#allocation10], 1024
        $region52: #{tpu_custom_call.1} parent=35 // pred_fallthru
          _
        %s268 = sand.u32 %s36, 1
        %s269 = scalar_lea.sflag [#allocation4], %s268
        %s270 = sand.u32 %s36, 1
        %s271 = smul.addr %s270, 8
        %s272 = scalar_lea.vmem [#allocation3], %s271
        %p273 = pneg %p49
        %p274 = pneg %p46
        %p275 = pneg %p70
        %p276 = pneg %p67
        %p277 = pneg %p91
        %p278 = pneg %p88
        %p279 = pneg %p112
        %p280 = pneg %p109
        %p281 = pneg %p138
        %p282 = pneg %p135
        %s283 = sand.u32 %s125, 1
        %s284 = scalar_lea.sflag [#allocation5], %s283
        %s285 = sand.u32 %s125, 1
        %s286 = smul.addr %s285, 8
        %s287 = scalar_lea.vmem [#allocation11], %s286
        %p288 = pneg %p164
        %p289 = pneg %p161
        %s290 = sand.u32 %s151, 1
        %s291 = scalar_lea.sflag [#allocation13], %s290
        %s292 = sand.u32 %s151, 1
        %s293 = smul.addr %s292, 32
        %s294 = scalar_lea.vmem [#allocation12], %s293
        %v295 = vld [vmem:[%s251] sm:$0xff]
        %v296 = vld [vmem:[#allocation6] sm:$0xff]
        %v297 = vld [vmem:[#allocation6 + $0x8] sm:$0xff]
        %v298 = vld [vmem:[#allocation6 + $0x10] sm:$0xff]
        %v299 = vld [vmem:[#allocation6 + $0x18] sm:$0xff]
        %v300 = vld [vmem:[#allocation6 + $0x20] sm:$0xff]
        %v301 = vld [vmem:[#allocation6 + $0x28] sm:$0xff]
        %v302 = vld [vmem:[#allocation6 + $0x30] sm:$0xff]
        %v303 = vld [vmem:[#allocation6 + $0x38] sm:$0xff]
        %vm304 = vcmask 523264
        %v306 = vsel %vm304, %v295, 0
        %308 = vmatprep.subr.mxu0 0.0
        %309 = vmatpush1.msra.mxu0 %v296
        %310 = vmatprep.subr.mxu0 0.0
        %311 = vmatpush1.msra.mxu0 %v297
        %312 = vmatprep.subr.mxu0 0.0
        %313 = vmatpush1.msra.mxu0 %v298
        %314 = vmatprep.subr.mxu0 0.0
        %315 = vmatpush1.msra.mxu0 %v299
        %316 = vmatprep.subr.mxu0 0.0
        %317 = vmatpush1.msra.mxu0 %v300
        %318 = vmatprep.subr.mxu0 0.0
        %319 = vmatpush1.msra.mxu0 %v301
        %320 = vmatprep.subr.mxu0 0.0
        %321 = vmatpush1.msra.mxu0 %v302
        %322 = vmatprep.subr.mxu0 0.0
        %323 = vmatpush1.msra.mxu0 %v303
        %324 = vmatprep.subr.mxu0 0.0
        %325 = vmatpush1.msra.mxu0 0.0
        %326 = vmatprep.subr.mxu0 0.0
        %327 = vmatpush1.msra.mxu0 0.0
        %328 = vmatprep.subr.mxu0 0.0
        %329 = vmatpush1.msra.mxu0 0.0
        %330 = vmatprep.subr.mxu0 0.0
        %331 = vmatpush1.msra.mxu0 0.0
        %332 = vmatprep.subr.mxu0 0.0
        %333 = vmatpush1.msra.mxu0 0.0
        %334 = vmatprep.subr.mxu0 0.0
        %335 = vmatpush1.msra.mxu0 0.0
        %336 = vmatprep.subr.mxu0 0.0
        %337 = vmatpush1.msra.mxu0 0.0
        %338 = vmatprep.subr.mxu0 0.0
        %339 = vmatpush1.msra.mxu0 0.0
        %340 = vmatprep.subr.mxu0 0.0
        %341 = vmatpush1.msra.mxu0 0.0
        %342 = vmatprep.subr.mxu0 0.0
        %343 = vmatpush1.msra.mxu0 0.0
        %344 = vmatprep.subr.mxu0 0.0
        %345 = vmatpush1.msra.mxu0 0.0
        %346 = vmatprep.subr.mxu0 0.0
        %347 = vmatpush1.msra.mxu0 0.0
        %348 = vmatprep.subr.mxu0 0.0
        %349 = vmatpush1.msra.mxu0 0.0
        %350 = vmatprep.subr.mxu0 0.0
        %351 = vmatpush1.msra.mxu0 0.0
        %352 = vmatprep.subr.mxu0 0.0
        %353 = vmatpush1.msra.mxu0 0.0
        %354 = vmatprep.subr.mxu0 0.0
        %355 = vmatpush1.msra.mxu0 0.0
        %356 = vmatprep.subr.mxu0 0.0
        %357 = vmatpush1.msra.mxu0 0.0
        %358 = vmatprep.subr.mxu0 0.0
        %359 = vmatpush1.msra.mxu0 0.0
        %360 = vmatprep.subr.mxu0 0.0
        %361 = vmatpush1.msra.mxu0 0.0
        %362 = vmatprep.subr.mxu0 0.0
        %363 = vmatpush1.msra.mxu0 0.0
        %364 = vmatprep.subr.mxu0 0.0
        %365 = vmatpush1.msra.mxu0 0.0
        %366 = vmatprep.subr.mxu0 0.0
        %367 = vmatpush1.msra.mxu0 0.0
        %368 = vmatprep.subr.mxu0 0.0
        %369 = vmatpush1.msra.mxu0 0.0
        %370 = vmatprep.subr.mxu0 0.0
        %371 = vmatpush1.msra.mxu0 0.0
        %372 = vmatprep.mubr.f32.mxu0 0.0
        %373 = vmatmul.mubr.f32.gmra.mrb[0].mxu0 %v306
        %v374 = vpop.f32.mrb[0].mxu0
        %v375 = vadd.f32 0.0, %v374
        %v376 = vpop.f32.mrb[0].mxu0
        %377 = vdwg.mxu0
        %v378 = vld [vmem:[#allocation8] sm:$0xff]
        %v379 = vld [vmem:[#allocation8 + $0x8] sm:$0xff]
        %v380 = vld [vmem:[#allocation8 + $0x10] sm:$0xff]
        %v381 = vld [vmem:[#allocation8 + $0x18] sm:$0xff]
        %v382 = vld [vmem:[#allocation8 + $0x20] sm:$0xff]
        %v383 = vld [vmem:[#allocation8 + $0x28] sm:$0xff]
        %v384 = vld [vmem:[#allocation8 + $0x30] sm:$0xff]
        %v385 = vld [vmem:[#allocation8 + $0x38] sm:$0xff]
        %386 = vmatprep.subr.mxu0 0.0
        %387 = vmatpush1.msra.mxu0 %v378
        %388 = vmatprep.subr.mxu0 0.0
        %389 = vmatpush1.msra.mxu0 %v379
        %390 = vmatprep.subr.mxu0 0.0
        %391 = vmatpush1.msra.mxu0 %v380
        %392 = vmatprep.subr.mxu0 0.0
        %393 = vmatpush1.msra.mxu0 %v381
        %394 = vmatprep.subr.mxu0 0.0
        %395 = vmatpush1.msra.mxu0 %v382
        %396 = vmatprep.subr.mxu0 0.0
        %397 = vmatpush1.msra.mxu0 %v383
        %398 = vmatprep.subr.mxu0 0.0
        %399 = vmatpush1.msra.mxu0 %v384
        %400 = vmatprep.subr.mxu0 0.0
        %401 = vmatpush1.msra.mxu0 %v385
        %402 = vmatprep.subr.mxu0 0.0
        %403 = vmatpush1.msra.mxu0 0.0
        %404 = vmatprep.subr.mxu0 0.0
        %405 = vmatpush1.msra.mxu0 0.0
        %406 = vmatprep.subr.mxu0 0.0
        %407 = vmatpush1.msra.mxu0 0.0
        %408 = vmatprep.subr.mxu0 0.0
        %409 = vmatpush1.msra.mxu0 0.0
        %410 = vmatprep.subr.mxu0 0.0
        %411 = vmatpush1.msra.mxu0 0.0
        %412 = vmatprep.subr.mxu0 0.0
        %413 = vmatpush1.msra.mxu0 0.0
        %414 = vmatprep.subr.mxu0 0.0
        %415 = vmatpush1.msra.mxu0 0.0
        %416 = vmatprep.subr.mxu0 0.0
        %417 = vmatpush1.msra.mxu0 0.0
        %418 = vmatprep.subr.mxu0 0.0
        %419 = vmatpush1.msra.mxu0 0.0
        %420 = vmatprep.subr.mxu0 0.0
        %421 = vmatpush1.msra.mxu0 0.0
        %422 = vmatprep.subr.mxu0 0.0
        %423 = vmatpush1.msra.mxu0 0.0
        %424 = vmatprep.subr.mxu0 0.0
        %425 = vmatpush1.msra.mxu0 0.0
        %426 = vmatprep.subr.mxu0 0.0
        %427 = vmatpush1.msra.mxu0 0.0
        %428 = vmatprep.subr.mxu0 0.0
        %429 = vmatpush1.msra.mxu0 0.0
        %430 = vmatprep.subr.mxu0 0.0
        %431 = vmatpush1.msra.mxu0 0.0
        %432 = vmatprep.subr.mxu0 0.0
        %433 = vmatpush1.msra.mxu0 0.0
        %434 = vmatprep.subr.mxu0 0.0
        %435 = vmatpush1.msra.mxu0 0.0
        %436 = vmatprep.subr.mxu0 0.0
        %437 = vmatpush1.msra.mxu0 0.0
        %438 = vmatprep.subr.mxu0 0.0
        %439 = vmatpush1.msra.mxu0 0.0
        %440 = vmatprep.subr.mxu0 0.0
        %441 = vmatpush1.msra.mxu0 0.0
        %442 = vmatprep.subr.mxu0 0.0
        %443 = vmatpush1.msra.mxu0 0.0
        %444 = vmatprep.subr.mxu0 0.0
        %445 = vmatpush1.msra.mxu0 0.0
        %446 = vmatprep.subr.mxu0 0.0
        %447 = vmatpush1.msra.mxu0 0.0
        %448 = vmatprep.subr.mxu0 0.0
        %449 = vmatpush1.msra.mxu0 0.0
        %450 = vmatprep.mubr.f32.mxu0 0.0
        %451 = vmatmul.mubr.f32.gmra.mrb[0].mxu0 %v306
        %v452 = vpop.f32.mrb[0].mxu0
        %v453 = vadd.f32 0.0, %v452
        %v454 = vpop.f32.mrb[0].mxu0
        %455 = vdwg.mxu0
        %v456 = vld [vmem:[#allocation9] sm:$0xff]
        %v457 = vld [vmem:[#allocation9 + $0x8] sm:$0xff]
        %v458 = vld [vmem:[#allocation9 + $0x10] sm:$0xff]
        %v459 = vld [vmem:[#allocation9 + $0x18] sm:$0xff]
        %v460 = vld [vmem:[#allocation9 + $0x20] sm:$0xff]
        %v461 = vld [vmem:[#allocation9 + $0x28] sm:$0xff]
        %v462 = vld [vmem:[#allocation9 + $0x30] sm:$0xff]
        %v463 = vld [vmem:[#allocation9 + $0x38] sm:$0xff]
        %464 = vmatprep.subr.mxu0 0.0
        %465 = vmatpush1.msra.mxu0 %v456
        %466 = vmatprep.subr.mxu0 0.0
        %467 = vmatpush1.msra.mxu0 %v457
        %468 = vmatprep.subr.mxu0 0.0
        %469 = vmatpush1.msra.mxu0 %v458
        %470 = vmatprep.subr.mxu0 0.0
        %471 = vmatpush1.msra.mxu0 %v459
        %472 = vmatprep.subr.mxu0 0.0
        %473 = vmatpush1.msra.mxu0 %v460
        %474 = vmatprep.subr.mxu0 0.0
        %475 = vmatpush1.msra.mxu0 %v461
        %476 = vmatprep.subr.mxu0 0.0
        %477 = vmatpush1.msra.mxu0 %v462
        %478 = vmatprep.subr.mxu0 0.0
        %479 = vmatpush1.msra.mxu0 %v463
        %480 = vmatprep.subr.mxu0 0.0
        %481 = vmatpush1.msra.mxu0 0.0
        %482 = vmatprep.subr.mxu0 0.0
        %483 = vmatpush1.msra.mxu0 0.0
        %484 = vmatprep.subr.mxu0 0.0
        %485 = vmatpush1.msra.mxu0 0.0
        %486 = vmatprep.subr.mxu0 0.0
        %487 = vmatpush1.msra.mxu0 0.0
        %488 = vmatprep.subr.mxu0 0.0
        %489 = vmatpush1.msra.mxu0 0.0
        %490 = vmatprep.subr.mxu0 0.0
        %491 = vmatpush1.msra.mxu0 0.0
        %492 = vmatprep.subr.mxu0 0.0
        %493 = vmatpush1.msra.mxu0 0.0
        %494 = vmatprep.subr.mxu0 0.0
        %495 = vmatpush1.msra.mxu0 0.0
        %496 = vmatprep.subr.mxu0 0.0
        %497 = vmatpush1.msra.mxu0 0.0
        %498 = vmatprep.subr.mxu0 0.0
        %499 = vmatpush1.msra.mxu0 0.0
        %500 = vmatprep.subr.mxu0 0.0
        %501 = vmatpush1.msra.mxu0 0.0
        %502 = vmatprep.subr.mxu0 0.0
        %503 = vmatpush1.msra.mxu0 0.0
        %504 = vmatprep.subr.mxu0 0.0
        %505 = vmatpush1.msra.mxu0 0.0
        %506 = vmatprep.subr.mxu0 0.0
        %507 = vmatpush1.msra.mxu0 0.0
        %508 = vmatprep.subr.mxu0 0.0
        %509 = vmatpush1.msra.mxu0 0.0
        %510 = vmatprep.subr.mxu0 0.0
        %511 = vmatpush1.msra.mxu0 0.0
        %512 = vmatprep.subr.mxu0 0.0
        %513 = vmatpush1.msra.mxu0 0.0
        %514 = vmatprep.subr.mxu0 0.0
        %515 = vmatpush1.msra.mxu0 0.0
        %516 = vmatprep.subr.mxu0 0.0
        %517 = vmatpush1.msra.mxu0 0.0
        %518 = vmatprep.subr.mxu0 0.0
        %519 = vmatpush1.msra.mxu0 0.0
        %520 = vmatprep.subr.mxu0 0.0
        %521 = vmatpush1.msra.mxu0 0.0
        %522 = vmatprep.subr.mxu0 0.0
        %523 = vmatpush1.msra.mxu0 0.0
        %524 = vmatprep.subr.mxu0 0.0
        %525 = vmatpush1.msra.mxu0 0.0
        %526 = vmatprep.subr.mxu0 0.0
        %527 = vmatpush1.msra.mxu0 0.0
        %528 = vmatprep.mubr.f32.mxu0 0.0
        %529 = vmatmul.mubr.f32.gmra.mrb[0].mxu0 %v306
        %v530 = vpop.f32.mrb[0].mxu0
        %v531 = vadd.f32 0.0, %v530
        %v532 = vpop.f32.mrb[0].mxu0
        %533 = vdwg.mxu0
        %vm534 = vcmask 130048
        %v536 = vsel %vm534, %v375, 0
        %v539 = vsel %vm534, %v453, 0
        %541 = vmatprep.subr.mxu0 0.0
        %542 = vmatpush1.xpose.msra.mxu0 %v539
        %543 = vmatprep.subr.mxu0 0.0
        %544 = vmatpush1.xpose.msra.mxu0 0.0
        %545 = vmatprep.subr.mxu0 0.0
        %546 = vmatpush1.xpose.msra.mxu0 0.0
        %547 = vmatprep.subr.mxu0 0.0
        %548 = vmatpush1.xpose.msra.mxu0 0.0
        %549 = vmatprep.subr.mxu0 0.0
        %550 = vmatpush1.xpose.msra.mxu0 0.0
        %551 = vmatprep.subr.mxu0 0.0
        %552 = vmatpush1.xpose.msra.mxu0 0.0
        %553 = vmatprep.subr.mxu0 0.0
        %554 = vmatpush1.xpose.msra.mxu0 0.0
        %555 = vmatprep.subr.mxu0 0.0
        %556 = vmatpush1.xpose.msra.mxu0 0.0
        %557 = vmatprep.subr.mxu0 0.0
        %558 = vmatpush1.xpose.msra.mxu0 0.0
        %559 = vmatprep.subr.mxu0 0.0
        %560 = vmatpush1.xpose.msra.mxu0 0.0
        %561 = vmatprep.subr.mxu0 0.0
        %562 = vmatpush1.xpose.msra.mxu0 0.0
        %563 = vmatprep.subr.mxu0 0.0
        %564 = vmatpush1.xpose.msra.mxu0 0.0
        %565 = vmatprep.subr.mxu0 0.0
        %566 = vmatpush1.xpose.msra.mxu0 0.0
        %567 = vmatprep.subr.mxu0 0.0
        %568 = vmatpush1.xpose.msra.mxu0 0.0
        %569 = vmatprep.subr.mxu0 0.0
        %570 = vmatpush1.xpose.msra.mxu0 0.0
        %571 = vmatprep.subr.mxu0 0.0
        %572 = vmatpush1.xpose.msra.mxu0 0.0
        %573 = vmatprep.subr.mxu0 0.0
        %574 = vmatpush1.xpose.msra.mxu0 0.0
        %575 = vmatprep.subr.mxu0 0.0
        %576 = vmatpush1.xpose.msra.mxu0 0.0
        %577 = vmatprep.subr.mxu0 0.0
        %578 = vmatpush1.xpose.msra.mxu0 0.0
        %579 = vmatprep.subr.mxu0 0.0
        %580 = vmatpush1.xpose.msra.mxu0 0.0
        %581 = vmatprep.subr.mxu0 0.0
        %582 = vmatpush1.xpose.msra.mxu0 0.0
        %583 = vmatprep.subr.mxu0 0.0
        %584 = vmatpush1.xpose.msra.mxu0 0.0
        %585 = vmatprep.subr.mxu0 0.0
        %586 = vmatpush1.xpose.msra.mxu0 0.0
        %587 = vmatprep.subr.mxu0 0.0
        %588 = vmatpush1.xpose.msra.mxu0 0.0
        %589 = vmatprep.subr.mxu0 0.0
        %590 = vmatpush1.xpose.msra.mxu0 0.0
        %591 = vmatprep.subr.mxu0 0.0
        %592 = vmatpush1.xpose.msra.mxu0 0.0
        %593 = vmatprep.subr.mxu0 0.0
        %594 = vmatpush1.xpose.msra.mxu0 0.0
        %595 = vmatprep.subr.mxu0 0.0
        %596 = vmatpush1.xpose.msra.mxu0 0.0
        %597 = vmatprep.subr.mxu0 0.0
        %598 = vmatpush1.xpose.msra.mxu0 0.0
        %599 = vmatprep.subr.mxu0 0.0
        %600 = vmatpush1.xpose.msra.mxu0 0.0
        %601 = vmatprep.subr.mxu0 0.0
        %602 = vmatpush1.xpose.msra.mxu0 0.0
        %603 = vmatprep.subr.mxu0 0.0
        %604 = vmatpush1.xpose.msra.mxu0 0.0
        %605 = vmatprep.mubr.f32.mxu0 0.0
        %606 = vmatmul.mubr.f32.gmra.mrb[0].mxu0 %v536
        %v607 = vpop.f32.mrb[0].mxu0
        %v608 = vadd.f32 0.0, %v607
        %v609 = vpop.f32.mrb[0].mxu0
        %610 = vdwg.mxu0
        %vm611 = vcmask 64512
        %v612 = vsel %vm611, %v608, -inf
        %613 = vmax.xlane.f32.xlu0 %v612
        %v614 = vpop.xlane.xlu0 %613
        %v615 = vsub.f32 %v608, %v614
        %v616 = vmul.f32 %v615, 1.442695
        %v617 = vpow.pop %v616
        %v618 = vsel %vm611, %v617, 0.0
        %619 = vadd.xlane.f32.xlu0 %v618
        %v620 = vpop.xlane.xlu0 %619
        %v621 = vrcp.pop %v620
        %v622 = vmul.f32 %v617, %v621
        %623 = vst.msk [vmem:[%s294] sm:$0xff] %vm611, %v622
        %v625 = vsel %vm611, %v622, 0
        %627 = vmatprep.subr.mxu0 0.0
        %628 = vmatpush1.msra.mxu0 %v531
        %629 = vmatprep.subr.mxu0 0.0
        %630 = vmatpush1.msra.mxu0 0.0
        %631 = vmatprep.subr.mxu0 0.0
        %632 = vmatpush1.msra.mxu0 0.0
        %633 = vmatprep.subr.mxu0 0.0
        %634 = vmatpush1.msra.mxu0 0.0
        %635 = vmatprep.subr.mxu0 0.0
        %636 = vmatpush1.msra.mxu0 0.0
        %637 = vmatprep.subr.mxu0 0.0
        %638 = vmatpush1.msra.mxu0 0.0
        %639 = vmatprep.subr.mxu0 0.0
        %640 = vmatpush1.msra.mxu0 0.0
        %641 = vmatprep.subr.mxu0 0.0
        %642 = vmatpush1.msra.mxu0 0.0
        %643 = vmatprep.subr.mxu0 0.0
        %644 = vmatpush1.msra.mxu0 0.0
        %645 = vmatprep.subr.mxu0 0.0
        %646 = vmatpush1.msra.mxu0 0.0
        %647 = vmatprep.subr.mxu0 0.0
        %648 = vmatpush1.msra.mxu0 0.0
        %649 = vmatprep.subr.mxu0 0.0
        %650 = vmatpush1.msra.mxu0 0.0
        %651 = vmatprep.subr.mxu0 0.0
        %652 = vmatpush1.msra.mxu0 0.0
        %653 = vmatprep.subr.mxu0 0.0
        %654 = vmatpush1.msra.mxu0 0.0
        %655 = vmatprep.subr.mxu0 0.0
        %656 = vmatpush1.msra.mxu0 0.0
        %657 = vmatprep.subr.mxu0 0.0
        %658 = vmatpush1.msra.mxu0 0.0
        %659 = vmatprep.subr.mxu0 0.0
        %660 = vmatpush1.msra.mxu0 0.0
        %661 = vmatprep.subr.mxu0 0.0
        %662 = vmatpush1.msra.mxu0 0.0
        %663 = vmatprep.subr.mxu0 0.0
        %664 = vmatpush1.msra.mxu0 0.0
        %665 = vmatprep.subr.mxu0 0.0
        %666 = vmatpush1.msra.mxu0 0.0
        %667 = vmatprep.subr.mxu0 0.0
        %668 = vmatpush1.msra.mxu0 0.0
        %669 = vmatprep.subr.mxu0 0.0
        %670 = vmatpush1.msra.mxu0 0.0
        %671 = vmatprep.subr.mxu0 0.0
        %672 = vmatpush1.msra.mxu0 0.0
        %673 = vmatprep.subr.mxu0 0.0
        %674 = vmatpush1.msra.mxu0 0.0
        %675 = vmatprep.subr.mxu0 0.0
        %676 = vmatpush1.msra.mxu0 0.0
        %677 = vmatprep.subr.mxu0 0.0
        %678 = vmatpush1.msra.mxu0 0.0
        %679 = vmatprep.subr.mxu0 0.0
        %680 = vmatpush1.msra.mxu0 0.0
        %681 = vmatprep.subr.mxu0 0.0
        %682 = vmatpush1.msra.mxu0 0.0
        %683 = vmatprep.subr.mxu0 0.0
        %684 = vmatpush1.msra.mxu0 0.0
        %685 = vmatprep.subr.mxu0 0.0
        %686 = vmatpush1.msra.mxu0 0.0
        %687 = vmatprep.subr.mxu0 0.0
        %688 = vmatpush1.msra.mxu0 0.0
        %689 = vmatprep.subr.mxu0 0.0
        %690 = vmatpush1.msra.mxu0 0.0
        %691 = vmatprep.mubr.f32.mxu0 0.0
        %692 = vmatmul.mubr.f32.gmra.mrb[0].mxu0 %v625
        %v693 = vpop.f32.mrb[0].mxu0
        %v694 = vadd.f32 0.0, %v693
        %v695 = vpop.f32.mrb[0].mxu0
        %696 = vdwg.mxu0
        %697 = vst.msk [vmem:[#allocation2] sm:$0xff] %vm534, %v694
        %698 = vrot.lane.b32.xlu0 %v375, 112
        %v699 = vpop.permute.xlu0 %698
        %700 = vrot.lane.b32.xlu0 %v453, 112
        %v701 = vpop.permute.xlu0 %700
        %v702 = vsel %vm534, %v699, 0
        %v704 = vsel %vm534, %v701, 0
        %706 = vmatprep.subr.mxu0 0.0
        %707 = vmatpush1.xpose.msra.mxu0 %v704
        %708 = vmatprep.subr.mxu0 0.0
        %709 = vmatpush1.xpose.msra.mxu0 0.0
        %710 = vmatprep.subr.mxu0 0.0
        %711 = vmatpush1.xpose.msra.mxu0 0.0
        %712 = vmatprep.subr.mxu0 0.0
        %713 = vmatpush1.xpose.msra.mxu0 0.0
        %714 = vmatprep.subr.mxu0 0.0
        %715 = vmatpush1.xpose.msra.mxu0 0.0
        %716 = vmatprep.subr.mxu0 0.0
        %717 = vmatpush1.xpose.msra.mxu0 0.0
        %718 = vmatprep.subr.mxu0 0.0
        %719 = vmatpush1.xpose.msra.mxu0 0.0
        %720 = vmatprep.subr.mxu0 0.0
        %721 = vmatpush1.xpose.msra.mxu0 0.0
        %722 = vmatprep.subr.mxu0 0.0
        %723 = vmatpush1.xpose.msra.mxu0 0.0
        %724 = vmatprep.subr.mxu0 0.0
        %725 = vmatpush1.xpose.msra.mxu0 0.0
        %726 = vmatprep.subr.mxu0 0.0
        %727 = vmatpush1.xpose.msra.mxu0 0.0
        %728 = vmatprep.subr.mxu0 0.0
        %729 = vmatpush1.xpose.msra.mxu0 0.0
        %730 = vmatprep.subr.mxu0 0.0
        %731 = vmatpush1.xpose.msra.mxu0 0.0
        %732 = vmatprep.subr.mxu0 0.0
        %733 = vmatpush1.xpose.msra.mxu0 0.0
        %734 = vmatprep.subr.mxu0 0.0
        %735 = vmatpush1.xpose.msra.mxu0 0.0
        %736 = vmatprep.subr.mxu0 0.0
        %737 = vmatpush1.xpose.msra.mxu0 0.0
        %738 = vmatprep.subr.mxu0 0.0
        %739 = vmatpush1.xpose.msra.mxu0 0.0
        %740 = vmatprep.subr.mxu0 0.0
        %741 = vmatpush1.xpose.msra.mxu0 0.0
        %742 = vmatprep.subr.mxu0 0.0
        %743 = vmatpush1.xpose.msra.mxu0 0.0
        %744 = vmatprep.subr.mxu0 0.0
        %745 = vmatpush1.xpose.msra.mxu0 0.0
        %746 = vmatprep.subr.mxu0 0.0
        %747 = vmatpush1.xpose.msra.mxu0 0.0
        %748 = vmatprep.subr.mxu0 0.0
        %749 = vmatpush1.xpose.msra.mxu0 0.0
        %750 = vmatprep.subr.mxu0 0.0
        %751 = vmatpush1.xpose.msra.mxu0 0.0
        %752 = vmatprep.subr.mxu0 0.0
        %753 = vmatpush1.xpose.msra.mxu0 0.0
        %754 = vmatprep.subr.mxu0 0.0
        %755 = vmatpush1.xpose.msra.mxu0 0.0
        %756 = vmatprep.subr.mxu0 0.0
        %757 = vmatpush1.xpose.msra.mxu0 0.0
        %758 = vmatprep.subr.mxu0 0.0
        %759 = vmatpush1.xpose.msra.mxu0 0.0
        %760 = vmatprep.subr.mxu0 0.0
        %761 = vmatpush1.xpose.msra.mxu0 0.0
        %762 = vmatprep.subr.mxu0 0.0
        %763 = vmatpush1.xpose.msra.mxu0 0.0
        %764 = vmatprep.subr.mxu0 0.0
        %765 = vmatpush1.xpose.msra.mxu0 0.0
        %766 = vmatprep.subr.mxu0 0.0
        %767 = vmatpush1.xpose.msra.mxu0 0.0
        %768 = vmatprep.subr.mxu0 0.0
        %769 = vmatpush1.xpose.msra.mxu0 0.0
        %770 = vmatprep.mubr.f32.mxu0 0.0
        %771 = vmatmul.mubr.f32.gmra.mrb[0].mxu0 %v702
        %v772 = vpop.f32.mrb[0].mxu0
        %v773 = vadd.f32 0.0, %v772
        %v774 = vpop.f32.mrb[0].mxu0
        %775 = vdwg.mxu0
        %v776 = vsel %vm611, %v773, -inf
        %777 = vmax.xlane.f32.xlu0 %v776
        %v778 = vpop.xlane.xlu0 %777
        %v779 = vsub.f32 %v773, %v778
        %v780 = vmul.f32 %v779, 1.442695
        %v781 = vpow.pop %v780
        %v782 = vsel %vm611, %v781, 0.0
        %783 = vadd.xlane.f32.xlu0 %v782
        %v784 = vpop.xlane.xlu0 %783
        %v785 = vrcp.pop %v784
        %v786 = vmul.f32 %v781, %v785
        %s787 = scalar_lea.vmem %s294, 8 [#allocation12]
        %788 = vst.msk [vmem:[%s787] sm:$0xff] %vm611, %v786
        %790 = vrot.lane.b32.xlu0 %v531, 112
        %v791 = vpop.permute.xlu0 %790
        %v794 = vsel %vm611, %v786, 0
        %796 = vmatprep.subr.mxu0 0.0
        %797 = vmatpush1.msra.mxu0 %v791
        %798 = vmatprep.subr.mxu0 0.0
        %799 = vmatpush1.msra.mxu0 0.0
        %800 = vmatprep.subr.mxu0 0.0
        %801 = vmatpush1.msra.mxu0 0.0
        %802 = vmatprep.subr.mxu0 0.0
        %803 = vmatpush1.msra.mxu0 0.0
        %804 = vmatprep.subr.mxu0 0.0
        %805 = vmatpush1.msra.mxu0 0.0
        %806 = vmatprep.subr.mxu0 0.0
        %807 = vmatpush1.msra.mxu0 0.0
        %808 = vmatprep.subr.mxu0 0.0
        %809 = vmatpush1.msra.mxu0 0.0
        %810 = vmatprep.subr.mxu0 0.0
        %811 = vmatpush1.msra.mxu0 0.0
        %812 = vmatprep.subr.mxu0 0.0
        %813 = vmatpush1.msra.mxu0 0.0
        %814 = vmatprep.subr.mxu0 0.0
        %815 = vmatpush1.msra.mxu0 0.0
        %816 = vmatprep.subr.mxu0 0.0
        %817 = vmatpush1.msra.mxu0 0.0
        %818 = vmatprep.subr.mxu0 0.0
        %819 = vmatpush1.msra.mxu0 0.0
        %820 = vmatprep.subr.mxu0 0.0
        %821 = vmatpush1.msra.mxu0 0.0
        %822 = vmatprep.subr.mxu0 0.0
        %823 = vmatpush1.msra.mxu0 0.0
        %824 = vmatprep.subr.mxu0 0.0
        %825 = vmatpush1.msra.mxu0 0.0
        %826 = vmatprep.subr.mxu0 0.0
        %827 = vmatpush1.msra.mxu0 0.0
        %828 = vmatprep.subr.mxu0 0.0
        %829 = vmatpush1.msra.mxu0 0.0
        %830 = vmatprep.subr.mxu0 0.0
        %831 = vmatpush1.msra.mxu0 0.0
        %832 = vmatprep.subr.mxu0 0.0
        %833 = vmatpush1.msra.mxu0 0.0
        %834 = vmatprep.subr.mxu0 0.0
        %835 = vmatpush1.msra.mxu0 0.0
        %836 = vmatprep.subr.mxu0 0.0
        %837 = vmatpush1.msra.mxu0 0.0
        %838 = vmatprep.subr.mxu0 0.0
        %839 = vmatpush1.msra.mxu0 0.0
        %840 = vmatprep.subr.mxu0 0.0
        %841 = vmatpush1.msra.mxu0 0.0
        %842 = vmatprep.subr.mxu0 0.0
        %843 = vmatpush1.msra.mxu0 0.0
        %844 = vmatprep.subr.mxu0 0.0
        %845 = vmatpush1.msra.mxu0 0.0
        %846 = vmatprep.subr.mxu0 0.0
        %847 = vmatpush1.msra.mxu0 0.0
        %848 = vmatprep.subr.mxu0 0.0
        %849 = vmatpush1.msra.mxu0 0.0
        %850 = vmatprep.subr.mxu0 0.0
        %851 = vmatpush1.msra.mxu0 0.0
        %852 = vmatprep.subr.mxu0 0.0
        %853 = vmatpush1.msra.mxu0 0.0
        %854 = vmatprep.subr.mxu0 0.0
        %855 = vmatpush1.msra.mxu0 0.0
        %856 = vmatprep.subr.mxu0 0.0
        %857 = vmatpush1.msra.mxu0 0.0
        %858 = vmatprep.subr.mxu0 0.0
        %859 = vmatpush1.msra.mxu0 0.0
        %860 = vmatprep.mubr.f32.mxu0 0.0
        %861 = vmatmul.mubr.f32.gmra.mrb[0].mxu0 %v794
        %v862 = vpop.f32.mrb[0].mxu0
        %v863 = vadd.f32 0.0, %v862
        %v864 = vpop.f32.mrb[0].mxu0
        %865 = vdwg.mxu0
        %867 = vrot.lane.b32.xlu0 %v863, 16
        %v868 = vpop.permute.xlu0 %867
        %vm870 = vcmask 261248
        %871 = vst.msk [vmem:[#allocation2] sm:$0xff] %vm870, %v868
        %872 = vrot.lane.b32.xlu0 %v375, 96
        %v873 = vpop.permute.xlu0 %872
        %874 = vrot.lane.b32.xlu0 %v453, 96
        %v875 = vpop.permute.xlu0 %874
        %v876 = vsel %vm534, %v873, 0
        %v878 = vsel %vm534, %v875, 0
        %880 = vmatprep.subr.mxu0 0.0
        %881 = vmatpush1.xpose.msra.mxu0 %v878
        %882 = vmatprep.subr.mxu0 0.0
        %883 = vmatpush1.xpose.msra.mxu0 0.0
        %884 = vmatprep.subr.mxu0 0.0
        %885 = vmatpush1.xpose.msra.mxu0 0.0
        %886 = vmatprep.subr.mxu0 0.0
        %887 = vmatpush1.xpose.msra.mxu0 0.0
        %888 = vmatprep.subr.mxu0 0.0
        %889 = vmatpush1.xpose.msra.mxu0 0.0
        %890 = vmatprep.subr.mxu0 0.0
        %891 = vmatpush1.xpose.msra.mxu0 0.0
        %892 = vmatprep.subr.mxu0 0.0
        %893 = vmatpush1.xpose.msra.mxu0 0.0
        %894 = vmatprep.subr.mxu0 0.0
        %895 = vmatpush1.xpose.msra.mxu0 0.0
        %896 = vmatprep.subr.mxu0 0.0
        %897 = vmatpush1.xpose.msra.mxu0 0.0
        %898 = vmatprep.subr.mxu0 0.0
        %899 = vmatpush1.xpose.msra.mxu0 0.0
        %900 = vmatprep.subr.mxu0 0.0
        %901 = vmatpush1.xpose.msra.mxu0 0.0
        %902 = vmatprep.subr.mxu0 0.0
        %903 = vmatpush1.xpose.msra.mxu0 0.0
        %904 = vmatprep.subr.mxu0 0.0
        %905 = vmatpush1.xpose.msra.mxu0 0.0
        %906 = vmatprep.subr.mxu0 0.0
        %907 = vmatpush1.xpose.msra.mxu0 0.0
        %908 = vmatprep.subr.mxu0 0.0
        %909 = vmatpush1.xpose.msra.mxu0 0.0
        %910 = vmatprep.subr.mxu0 0.0
        %911 = vmatpush1.xpose.msra.mxu0 0.0
        %912 = vmatprep.subr.mxu0 0.0
        %913 = vmatpush1.xpose.msra.mxu0 0.0
        %914 = vmatprep.subr.mxu0 0.0
        %915 = vmatpush1.xpose.msra.mxu0 0.0
        %916 = vmatprep.subr.mxu0 0.0
        %917 = vmatpush1.xpose.msra.mxu0 0.0
        %918 = vmatprep.subr.mxu0 0.0
        %919 = vmatpush1.xpose.msra.mxu0 0.0
        %920 = vmatprep.subr.mxu0 0.0
        %921 = vmatpush1.xpose.msra.mxu0 0.0
        %922 = vmatprep.subr.mxu0 0.0
        %923 = vmatpush1.xpose.msra.mxu0 0.0
        %924 = vmatprep.subr.mxu0 0.0
        %925 = vmatpush1.xpose.msra.mxu0 0.0
        %926 = vmatprep.subr.mxu0 0.0
        %927 = vmatpush1.xpose.msra.mxu0 0.0
        %928 = vmatprep.subr.mxu0 0.0
        %929 = vmatpush1.xpose.msra.mxu0 0.0
        %930 = vmatprep.subr.mxu0 0.0
        %931 = vmatpush1.xpose.msra.mxu0 0.0
        %932 = vmatprep.subr.mxu0 0.0
        %933 = vmatpush1.xpose.msra.mxu0 0.0
        %934 = vmatprep.subr.mxu0 0.0
        %935 = vmatpush1.xpose.msra.mxu0 0.0
        %936 = vmatprep.subr.mxu0 0.0
        %937 = vmatpush1.xpose.msra.mxu0 0.0
        %938 = vmatprep.subr.mxu0 0.0
        %939 = vmatpush1.xpose.msra.mxu0 0.0
        %940 = vmatprep.subr.mxu0 0.0
        %941 = vmatpush1.xpose.msra.mxu0 0.0
        %942 = vmatprep.subr.mxu0 0.0
        %943 = vmatpush1.xpose.msra.mxu0 0.0
        %944 = vmatprep.mubr.f32.mxu0 0.0
        %945 = vmatmul.mubr.f32.gmra.mrb[0].mxu0 %v876
        %v946 = vpop.f32.mrb[0].mxu0
        %v947 = vadd.f32 0.0, %v946
        %v948 = vpop.f32.mrb[0].mxu0
        %949 = vdwg.mxu0
        %v950 = vsel %vm611, %v947, -inf
        %951 = vmax.xlane.f32.xlu0 %v950
        %v952 = vpop.xlane.xlu0 %951
        %v953 = vsub.f32 %v947, %v952
        %v954 = vmul.f32 %v953, 1.442695
        %v955 = vpow.pop %v954
        %v956 = vsel %vm611, %v955, 0.0
        %957 = vadd.xlane.f32.xlu0 %v956
        %v958 = vpop.xlane.xlu0 %957
        %v959 = vrcp.pop %v958
        %v960 = vmul.f32 %v955, %v959
        %s961 = scalar_lea.vmem %s294, 16 [#allocation12]
        %962 = vst.msk [vmem:[%s961] sm:$0xff] %vm611, %v960
        %963 = vrot.lane.b32.xlu0 %v531, 96
        %v964 = vpop.permute.xlu0 %963
        %v967 = vsel %vm611, %v960, 0
        %969 = vmatprep.subr.mxu0 0.0
        %970 = vmatpush1.msra.mxu0 %v964
        %971 = vmatprep.subr.mxu0 0.0
        %972 = vmatpush1.msra.mxu0 0.0
        %973 = vmatprep.subr.mxu0 0.0
        %974 = vmatpush1.msra.mxu0 0.0
        %975 = vmatprep.subr.mxu0 0.0
        %976 = vmatpush1.msra.mxu0 0.0
        %977 = vmatprep.subr.mxu0 0.0
        %978 = vmatpush1.msra.mxu0 0.0
        %979 = vmatprep.subr.mxu0 0.0
        %980 = vmatpush1.msra.mxu0 0.0
        %981 = vmatprep.subr.mxu0 0.0
        %982 = vmatpush1.msra.mxu0 0.0
        %983 = vmatprep.subr.mxu0 0.0
        %984 = vmatpush1.msra.mxu0 0.0
        %985 = vmatprep.subr.mxu0 0.0
        %986 = vmatpush1.msra.mxu0 0.0
        %987 = vmatprep.subr.mxu0 0.0
        %988 = vmatpush1.msra.mxu0 0.0
        %989 = vmatprep.subr.mxu0 0.0
        %990 = vmatpush1.msra.mxu0 0.0
        %991 = vmatprep.subr.mxu0 0.0
        %992 = vmatpush1.msra.mxu0 0.0
        %993 = vmatprep.subr.mxu0 0.0
        %994 = vmatpush1.msra.mxu0 0.0
        %995 = vmatprep.subr.mxu0 0.0
        %996 = vmatpush1.msra.mxu0 0.0
        %997 = vmatprep.subr.mxu0 0.0
        %998 = vmatpush1.msra.mxu0 0.0
        %999 = vmatprep.subr.mxu0 0.0
        %1000 = vmatpush1.msra.mxu0 0.0
        %1001 = vmatprep.subr.mxu0 0.0
        %1002 = vmatpush1.msra.mxu0 0.0
        %1003 = vmatprep.subr.mxu0 0.0
        %1004 = vmatpush1.msra.mxu0 0.0
        %1005 = vmatprep.subr.mxu0 0.0
        %1006 = vmatpush1.msra.mxu0 0.0
        %1007 = vmatprep.subr.mxu0 0.0
        %1008 = vmatpush1.msra.mxu0 0.0
        %1009 = vmatprep.subr.mxu0 0.0
        %1010 = vmatpush1.msra.mxu0 0.0
        %1011 = vmatprep.subr.mxu0 0.0
        %1012 = vmatpush1.msra.mxu0 0.0
        %1013 = vmatprep.subr.mxu0 0.0
        %1014 = vmatpush1.msra.mxu0 0.0
        %1015 = vmatprep.subr.mxu0 0.0
        %1016 = vmatpush1.msra.mxu0 0.0
        %1017 = vmatprep.subr.mxu0 0.0
        %1018 = vmatpush1.msra.mxu0 0.0
        %1019 = vmatprep.subr.mxu0 0.0
        %1020 = vmatpush1.msra.mxu0 0.0
        %1021 = vmatprep.subr.mxu0 0.0
        %1022 = vmatpush1.msra.mxu0 0.0
        %1023 = vmatprep.subr.mxu0 0.0
        %1024 = vmatpush1.msra.mxu0 0.0
        %1025 = vmatprep.subr.mxu0 0.0
        %1026 = vmatpush1.msra.mxu0 0.0
        %1027 = vmatprep.subr.mxu0 0.0
        %1028 = vmatpush1.msra.mxu0 0.0
        %1029 = vmatprep.subr.mxu0 0.0
        %1030 = vmatpush1.msra.mxu0 0.0
        %1031 = vmatprep.subr.mxu0 0.0
        %1032 = vmatpush1.msra.mxu0 0.0
        %1033 = vmatprep.mubr.f32.mxu0 0.0
        %1034 = vmatmul.mubr.f32.gmra.mrb[0].mxu0 %v967
        %v1035 = vpop.f32.mrb[0].mxu0
        %v1036 = vadd.f32 0.0, %v1035
        %v1037 = vpop.f32.mrb[0].mxu0
        %1038 = vdwg.mxu0
        %1040 = vrot.lane.b32.xlu0 %v1036, 32
        %v1041 = vpop.permute.xlu0 %1040
        %vm1043 = vcmask 392448
        %1044 = vst.msk [vmem:[#allocation2] sm:$0xff] %vm1043, %v1041
        %1045 = vrot.lane.b32.xlu0 %v375, 80
        %v1046 = vpop.permute.xlu0 %1045
        %1047 = vrot.lane.b32.xlu0 %v453, 80
        %v1048 = vpop.permute.xlu0 %1047
        %v1049 = vsel %vm534, %v1046, 0
        %v1051 = vsel %vm534, %v1048, 0
        %1053 = vmatprep.subr.mxu0 0.0
        %1054 = vmatpush1.xpose.msra.mxu0 %v1051
        %1055 = vmatprep.subr.mxu0 0.0
        %1056 = vmatpush1.xpose.msra.mxu0 0.0
        %1057 = vmatprep.subr.mxu0 0.0
        %1058 = vmatpush1.xpose.msra.mxu0 0.0
        %1059 = vmatprep.subr.mxu0 0.0
        %1060 = vmatpush1.xpose.msra.mxu0 0.0
        %1061 = vmatprep.subr.mxu0 0.0
        %1062 = vmatpush1.xpose.msra.mxu0 0.0
        %1063 = vmatprep.subr.mxu0 0.0
        %1064 = vmatpush1.xpose.msra.mxu0 0.0
        %1065 = vmatprep.subr.mxu0 0.0
        %1066 = vmatpush1.xpose.msra.mxu0 0.0
        %1067 = vmatprep.subr.mxu0 0.0
        %1068 = vmatpush1.xpose.msra.mxu0 0.0
        %1069 = vmatprep.subr.mxu0 0.0
        %1070 = vmatpush1.xpose.msra.mxu0 0.0
        %1071 = vmatprep.subr.mxu0 0.0
        %1072 = vmatpush1.xpose.msra.mxu0 0.0
        %1073 = vmatprep.subr.mxu0 0.0
        %1074 = vmatpush1.xpose.msra.mxu0 0.0
        %1075 = vmatprep.subr.mxu0 0.0
        %1076 = vmatpush1.xpose.msra.mxu0 0.0
        %1077 = vmatprep.subr.mxu0 0.0
        %1078 = vmatpush1.xpose.msra.mxu0 0.0
        %1079 = vmatprep.subr.mxu0 0.0
        %1080 = vmatpush1.xpose.msra.mxu0 0.0
        %1081 = vmatprep.subr.mxu0 0.0
        %1082 = vmatpush1.xpose.msra.mxu0 0.0
        %1083 = vmatprep.subr.mxu0 0.0
        %1084 = vmatpush1.xpose.msra.mxu0 0.0
        %1085 = vmatprep.subr.mxu0 0.0
        %1086 = vmatpush1.xpose.msra.mxu0 0.0
        %1087 = vmatprep.subr.mxu0 0.0
        %1088 = vmatpush1.xpose.msra.mxu0 0.0
        %1089 = vmatprep.subr.mxu0 0.0
        %1090 = vmatpush1.xpose.msra.mxu0 0.0
        %1091 = vmatprep.subr.mxu0 0.0
        %1092 = vmatpush1.xpose.msra.mxu0 0.0
        %1093 = vmatprep.subr.mxu0 0.0
        %1094 = vmatpush1.xpose.msra.mxu0 0.0
        %1095 = vmatprep.subr.mxu0 0.0
        %1096 = vmatpush1.xpose.msra.mxu0 0.0
        %1097 = vmatprep.subr.mxu0 0.0
        %1098 = vmatpush1.xpose.msra.mxu0 0.0
        %1099 = vmatprep.subr.mxu0 0.0
        %1100 = vmatpush1.xpose.msra.mxu0 0.0
        %1101 = vmatprep.subr.mxu0 0.0
        %1102 = vmatpush1.xpose.msra.mxu0 0.0
        %1103 = vmatprep.subr.mxu0 0.0
        %1104 = vmatpush1.xpose.msra.mxu0 0.0
        %1105 = vmatprep.subr.mxu0 0.0
        %1106 = vmatpush1.xpose.msra.mxu0 0.0
        %1107 = vmatprep.subr.mxu0 0.0
        %1108 = vmatpush1.xpose.msra.mxu0 0.0
        %1109 = vmatprep.subr.mxu0 0.0
        %1110 = vmatpush1.xpose.msra.mxu0 0.0
        %1111 = vmatprep.subr.mxu0 0.0
        %1112 = vmatpush1.xpose.msra.mxu0 0.0
        %1113 = vmatprep.subr.mxu0 0.0
        %1114 = vmatpush1.xpose.msra.mxu0 0.0
        %1115 = vmatprep.subr.mxu0 0.0
        %1116 = vmatpush1.xpose.msra.mxu0 0.0
        %1117 = vmatprep.mubr.f32.mxu0 0.0
        %1118 = vmatmul.mubr.f32.gmra.mrb[0].mxu0 %v1049
        %v1119 = vpop.f32.mrb[0].mxu0
        %v1120 = vadd.f32 0.0, %v1119
        %v1121 = vpop.f32.mrb[0].mxu0
        %1122 = vdwg.mxu0
        %v1123 = vsel %vm611, %v1120, -inf
        %1124 = vmax.xlane.f32.xlu0 %v1123
        %v1125 = vpop.xlane.xlu0 %1124
        %v1126 = vsub.f32 %v1120, %v1125
        %v1127 = vmul.f32 %v1126, 1.442695
        %v1128 = vpow.pop %v1127
        %v1129 = vsel %vm611, %v1128, 0.0
        %1130 = vadd.xlane.f32.xlu0 %v1129
        %v1131 = vpop.xlane.xlu0 %1130
        %v1132 = vrcp.pop %v1131
        %v1133 = vmul.f32 %v1128, %v1132
        %s1134 = scalar_lea.vmem %s294, 24 [#allocation12]
        %1135 = vst.msk [vmem:[%s1134] sm:$0xff] %vm611, %v1133
        %1136 = vrot.lane.b32.xlu0 %v531, 80
        %v1137 = vpop.permute.xlu0 %1136
        %v1140 = vsel %vm611, %v1133, 0
        %1142 = vmatprep.subr.mxu0 0.0
        %1143 = vmatpush1.msra.mxu0 %v1137
        %1144 = vmatprep.subr.mxu0 0.0
        %1145 = vmatpush1.msra.mxu0 0.0
        %1146 = vmatprep.subr.mxu0 0.0
        %1147 = vmatpush1.msra.mxu0 0.0
        %1148 = vmatprep.subr.mxu0 0.0
        %1149 = vmatpush1.msra.mxu0 0.0
        %1150 = vmatprep.subr.mxu0 0.0
        %1151 = vmatpush1.msra.mxu0 0.0
        %1152 = vmatprep.subr.mxu0 0.0
        %1153 = vmatpush1.msra.mxu0 0.0
        %1154 = vmatprep.subr.mxu0 0.0
        %1155 = vmatpush1.msra.mxu0 0.0
        %1156 = vmatprep.subr.mxu0 0.0
        %1157 = vmatpush1.msra.mxu0 0.0
        %1158 = vmatprep.subr.mxu0 0.0
        %1159 = vmatpush1.msra.mxu0 0.0
        %1160 = vmatprep.subr.mxu0 0.0
        %1161 = vmatpush1.msra.mxu0 0.0
        %1162 = vmatprep.subr.mxu0 0.0
        %1163 = vmatpush1.msra.mxu0 0.0
        %1164 = vmatprep.subr.mxu0 0.0
        %1165 = vmatpush1.msra.mxu0 0.0
        %1166 = vmatprep.subr.mxu0 0.0
        %1167 = vmatpush1.msra.mxu0 0.0
        %1168 = vmatprep.subr.mxu0 0.0
        %1169 = vmatpush1.msra.mxu0 0.0
        %1170 = vmatprep.subr.mxu0 0.0
        %1171 = vmatpush1.msra.mxu0 0.0
        %1172 = vmatprep.subr.mxu0 0.0
        %1173 = vmatpush1.msra.mxu0 0.0
        %1174 = vmatprep.subr.mxu0 0.0
        %1175 = vmatpush1.msra.mxu0 0.0
        %1176 = vmatprep.subr.mxu0 0.0
        %1177 = vmatpush1.msra.mxu0 0.0
        %1178 = vmatprep.subr.mxu0 0.0
        %1179 = vmatpush1.msra.mxu0 0.0
        %1180 = vmatprep.subr.mxu0 0.0
        %1181 = vmatpush1.msra.mxu0 0.0
        %1182 = vmatprep.subr.mxu0 0.0
        %1183 = vmatpush1.msra.mxu0 0.0
        %1184 = vmatprep.subr.mxu0 0.0
        %1185 = vmatpush1.msra.mxu0 0.0
        %1186 = vmatprep.subr.mxu0 0.0
        %1187 = vmatpush1.msra.mxu0 0.0
        %1188 = vmatprep.subr.mxu0 0.0
        %1189 = vmatpush1.msra.mxu0 0.0
        %1190 = vmatprep.subr.mxu0 0.0
        %1191 = vmatpush1.msra.mxu0 0.0
        %1192 = vmatprep.subr.mxu0 0.0
        %1193 = vmatpush1.msra.mxu0 0.0
        %1194 = vmatprep.subr.mxu0 0.0
        %1195 = vmatpush1.msra.mxu0 0.0
        %1196 = vmatprep.subr.mxu0 0.0
        %1197 = vmatpush1.msra.mxu0 0.0
        %1198 = vmatprep.subr.mxu0 0.0
        %1199 = vmatpush1.msra.mxu0 0.0
        %1200 = vmatprep.subr.mxu0 0.0
        %1201 = vmatpush1.msra.mxu0 0.0
        %1202 = vmatprep.subr.mxu0 0.0
        %1203 = vmatpush1.msra.mxu0 0.0
        %1204 = vmatprep.subr.mxu0 0.0
        %1205 = vmatpush1.msra.mxu0 0.0
        %1206 = vmatprep.mubr.f32.mxu0 0.0
        %1207 = vmatmul.mubr.f32.gmra.mrb[0].mxu0 %v1140
        %v1208 = vpop.f32.mrb[0].mxu0
        %v1209 = vadd.f32 0.0, %v1208
        %v1210 = vpop.f32.mrb[0].mxu0
        %1211 = vdwg.mxu0
        %1213 = vrot.lane.b32.xlu0 %v1209, 48
        %v1214 = vpop.permute.xlu0 %1213
        %vm1216 = vcmask 523648
        %1217 = vst.msk [vmem:[#allocation2] sm:$0xff] %vm1216, %v1214
        %v1218 = vld [vmem:[#allocation2] sm:$0xff]
        %1219 = vst.msk [vmem:[%s287] sm:$0xff] %vm304, %v1218
        %s1220 = sand.u32 %s125, 1
        %s1221 = scalar_lea.sflag [#allocation5], %s1220
        %s1222 = sand.u32 %s125, 1
        %s1223 = smul.addr %s1222, 8
        %s1224 = scalar_lea.vmem [#allocation11], %s1223
        %s1225 = sand.u32 %s151, 1
        %s1226 = scalar_lea.sflag [#allocation13], %s1225
        %s1227 = sand.u32 %s151, 1
        %s1228 = smul.addr %s1227, 32
        %s1229 = scalar_lea.vmem [#allocation12], %s1228
        // Predicated region
        $region53: #{tpu_custom_call.1} parent=35 // pred_check
          %p1230 = pneg %p135
        $region54: #{tpu_custom_call.1} parent=35 // pred_check_branch
          %1232 = sbr.rel (%p1230) target = $region56
        $region55: #{tpu_custom_call.1} parent=35 // pred_region
          %s1234 = ssub.s32 128, 128
          %1235 = vsyncadd %s1221, %s1234
          %s1236 = smul.addr %s28, 128
          %s1237 = scalar_lea.hbm %s4, %s1236
          %s1239 = sshll.u32 %s1224, 4
          %s1240 = int_to_ptr.vmem [resolvable:$true] %s1239
          %1242 = dma.vmem_to_hbm [thread:$0]  %s1240, 128, %s1237, %s1221
        $region56: #{tpu_custom_call.1} parent=35 // pred_fallthru
          _
        // Predicated region
        $region57: #{tpu_custom_call.1} parent=35 // pred_check
          %p1243 = pneg %p161
        $region58: #{tpu_custom_call.1} parent=35 // pred_check_branch
          %1245 = sbr.rel (%p1243) target = $region60
        $region59: #{tpu_custom_call.1} parent=35 // pred_region
          %s1247 = ssub.s32 512, 512
          %1248 = vsyncadd %s1226, %s1247
          %s1249 = smul.addr %s28, 4
          %s1250 = smul.addr %s1249, 128
          %s1251 = scalar_lea.hbm %s5, %s1250
          %s1252 = sshll.u32 %s1229, 4
          %s1253 = int_to_ptr.vmem [resolvable:$true] %s1252
          %1258 = dma.vmem_to_hbm [thread:$0]  %s1253, 512, %s1251, %s1226, 128, 128, 8
        $region60: #{tpu_custom_call.1} parent=35 // pred_fallthru
          _
      $region36: #{tpu_custom_call.1} parent=5 // pred_fallthru
        _
      %p1259 = scmp.le.s32.totalorder 2, %s23
      // Predicated region
      $region61: #{tpu_custom_call.1} parent=5 // pred_check
        %p1260 = pneg %p1259
      $region62: #{tpu_custom_call.1} parent=5 // pred_check_branch
        %1262 = sbr.rel (%p1260) target = $region64
      $region63: #{tpu_custom_call.1} parent=5 // pred_region
        %s1263 = ssub.s32 %s23, 2
        // Predicated region
        $region65: #{tpu_custom_call.1} parent=63 // pred_check
          %p1264 = pneg %p141
        $region66: #{tpu_custom_call.1} parent=63 // pred_check_branch
          %1266 = sbr.rel (%p1264) target = $region68
        $region67: #{tpu_custom_call.1} parent=63 // pred_region
          %s1267 = sand.u32 %s126, 1
          %s1268 = scalar_lea.sflag [#allocation5], %s1267
          %s1269 = sand.u32 %s126, 1
          %s1270 = smul.addr %s1269, 8
          %s1271 = scalar_lea.vmem [#allocation11], %s1270
          %1272 = dma.done %s1268, 128
        $region68: #{tpu_custom_call.1} parent=63 // pred_fallthru
          _
        // Predicated region
        $region69: #{tpu_custom_call.1} parent=63 // pred_check
          %p1273 = pneg %p167
        $region70: #{tpu_custom_call.1} parent=63 // pred_check_branch
          %1275 = sbr.rel (%p1273) target = $region72
        $region71: #{tpu_custom_call.1} parent=63 // pred_region
          %s1276 = sand.u32 %s152, 1
          %s1277 = scalar_lea.sflag [#allocation13], %s1276
          %s1278 = sand.u32 %s152, 1
          %s1279 = smul.addr %s1278, 32
          %s1280 = scalar_lea.vmem [#allocation12], %s1279
          %1281 = dma.done %s1277, 512
        $region72: #{tpu_custom_call.1} parent=63 // pred_fallthru
          _
      $region64: #{tpu_custom_call.1} parent=5 // pred_fallthru
        _
    $region6: #{tpu_custom_call.1} parent=1 // loop_footer
      %s27 = sadd.s32 1, %s23
    $region7: #{tpu_custom_call.1} parent=1 // loop_footer_branch
      %22 = sbr.rel target = $region3
    $region8: #{tpu_custom_call.1} parent=1 // loop_exit
      _
    %1282 = vsyncpa [#allocation4], 1
    %s1283 = scalar_lea.sflag [#allocation4], 1
    %1284 = vsyncpa %s1283, 1
    %1285 = vsyncpa [#allocation7], 1
    %1286 = vsyncpa [#allocation10], 1
    %1287 = vsyncpa [#allocation5], 1
    %s1288 = scalar_lea.sflag [#allocation5], 1
    %1289 = vsyncpa %s1288, 1
    %1290 = vsyncpa [#allocation13], 1
    %s1291 = scalar_lea.sflag [#allocation13], 1
    %1292 = vsyncpa %s1291, 1

</llo_original>
